<compile_context>
chip_gen: v5e
topology: v5e:2x2
jax: 0.10.0
libtpu: 0.0.40
codegen_flags: <defaults>
</compile_context>

<pallas_src>
import functools

import jax
import jax.numpy as jnp
import numpy as np
from jax.experimental import pallas as pl
from jax.experimental.pallas import tpu as pltpu


# ------------------------------ helpers -------------------------------------

def _round_up(x, m):
    return ((x + m - 1) // m) * m


def _tensorcores_per_chip():
    """Best-effort TensorCore count (v7x has 2/chip; v5e/v6e have 1)."""
    try:
        kind = jax.devices()[0].device_kind.lower()
    except Exception:
        return 1
    return 2 if "v7" in kind else 1


def _choose_batch_block(batch, cores):
    """Batch tile: multiple of 8, up to 256; keep G>=2 grid steps on 2-TC chips."""
    b8 = _round_up(batch, 8)
    bb = min(256, b8)
    if cores >= 2 and b8 >= 16:
        bb = min(bb, max(8, _round_up(b8 // 2, 8)))
    return bb


def _vmem_limit_bytes(S, bb, H, L, embed):
    f32 = 4
    blocks = S * bb * 4 * H + bb * embed                      # streamed input + output
    weights = (L * H * 4 * H                                   # w_hh
               + (L - 1) * (H * 4 * H + 4 * H)                 # w_ih / b, layers 1..L-1
               + 2 * L * H * embed + embed)                    # fc
    scratch = S * bb * 4 * H if L > 1 else 0
    total = (2 * blocks + 2 * weights + scratch) * f32         # x2: double buffering
    return int(min(max(4 * total, 4 << 20), 48 << 20))         # headroom, sane clamp


# ----------------------------- Pallas kernel --------------------------------

def _make_question_encoder_kernel(num_layers, seq_len, bb, hidden):
    """Kernel closure for fixed static dims.

    Ref order:
      inputs : gx (S, bb, 4H)  precomputed layer-0 gates (tanh(emb)@W_ih0 + b0),
               w_hhT_l (H, 4H)            for l = 0..L-1,
               [w_ihT_l (H, 4H), b_l (1, 4H)]  for l = 1..L-1,
               fc_wT (2*L*H, embed), fc_b (1, embed)
      output : out (bb, embed)
      scratch: stage (S, bb, 4H)  (only when L > 1)
    """
    H = hidden
    S = seq_len
    L = num_layers

    def kernel(*refs):
        gx_ref = refs[0]
        w_hh_refs = refs[1:1 + L]
        idx = 1 + L
        w_ih_refs = {}
        b_refs = {}
        for l in range(1, L):
            w_ih_refs[l] = refs[idx]
            b_refs[l] = refs[idx + 1]
            idx += 2
        fc_w_ref = refs[idx]
        fc_b_ref = refs[idx + 1]
        out_ref = refs[idx + 2]
        stage_ref = refs[idx + 3] if L > 1 else None

        finals = []
        for l in range(L):
            # Loop-invariant MXU operands cast once per layer (bf16 inputs, f32 acc).
            w_hh = w_hh_refs[l][...].astype(jnp.bfloat16)           # (H, 4H)
            has_next = (l + 1) < L
            if has_next:
                w_ih_next = w_ih_refs[l + 1][...].astype(jnp.bfloat16)
                # Hoisted bias broadcast (JAX does not CSE broadcast_in_dim).
                b_next = jnp.broadcast_to(b_refs[l + 1][...], (bb, 4 * H))

            h = jnp.zeros((bb, H), jnp.float32)
            c = jnp.zeros((bb, H), jnp.float32)

            # Full static unroll of the recurrence (S small & static); only
            # h @ W_hh + precomputed gates + elementwise sit on the serial chain.
            for t in range(S):
                g_in = gx_ref[t] if l == 0 else stage_ref[t]        # (bb, 4H) f32
                gates = g_in + jnp.dot(h.astype(jnp.bfloat16), w_hh,
                                       preferred_element_type=jnp.float32)
                sig = jax.nn.sigmoid(gates)        # one EUP pass covering i, f, o
                tng = jnp.tanh(gates)              # one EUP pass covering g
                i_g = sig[:, 0 * H:1 * H]
                f_g = sig[:, 1 * H:2 * H]
                o_g = sig[:, 3 * H:4 * H]
                g_g = tng[:, 2 * H:3 * H]
                c = f_g * c + i_g * g_g
                h = o_g * jnp.tanh(c)
                if has_next:
                    # Next layer's input projection depends only on h_t of this layer:
                    # computed here (off the next layer's serial chain) and staged in
                    # VMEM scratch to bound vreg live ranges.
                    stage_ref[t] = (jnp.dot(h.astype(jnp.bfloat16), w_ih_next,
                                            preferred_element_type=jnp.float32)
                                    + b_next)
            finals.append((h, c))

        # ---- Final FC: lane-concat [h0||c0||h1||c1||...] (2*L*H lanes), one tanh,
        #      one full-K MXU matmul + bias.
        feat = jnp.concatenate([arr for hc in finals for arr in hc], axis=1)
        feat = jnp.tanh(feat)
        out = (jnp.dot(feat.astype(jnp.bfloat16),
                       fc_w_ref[...].astype(jnp.bfloat16),
                       preferred_element_type=jnp.float32)
               + fc_b_ref[...])
        out_ref[...] = out.astype(out_ref.dtype)

    return kernel


def question_encoder_pallas(question, params, *, num_layers, hidden_size,
                            embed_size, batch_block=None):
    """question: (B, S) int32 token ids.  Returns (B, embed_size) float32."""
    B, S = question.shape
    H = hidden_size
    L = num_layers

    cores = _tensorcores_per_chip()
    bb = _choose_batch_block(B, cores) if batch_block is None else batch_block
    assert bb % 8 == 0 or bb == B, (bb, B)
    B_pad = _round_up(_round_up(B, 8), bb)
    G = B_pad // bb

    q = question
    if B_pad != B:
        q = jnp.pad(question, ((0, B_pad - B), (0, 0)))          # pad with token id 0

    # Glue: fold tanh(word2vec), the layer-0 input projection and its bias into a tiny
    # (vocab, 4H) table; one lane-dense gather produces the per-step layer-0 gates
    # directly in (S, B_pad, 4H) time-major layout (no big HBM transpose).
    # TODO(synk): optionally move this gather in-kernel via PrefetchScalarGridSpec
    #             row-gather to save one HBM round trip.
    proj0 = (jnp.tanh(params["embedding"].astype(jnp.float32))
             @ params["w_ihT"][0] + params["b"][0])               # (vocab, 4H)
    gx0 = jnp.take(proj0, q.T, axis=0).astype(jnp.float32)        # (S, B_pad, 4H)

    flat_inputs = [gx0]
    in_specs = [pl.BlockSpec((S, bb, 4 * H), lambda g: (0, g, 0))]
    for l in range(L):
        flat_inputs.append(params["w_hhT"][l])
        in_specs.append(pl.BlockSpec((H, 4 * H), lambda g: (0, 0)))
    for l in range(1, L):
        flat_inputs += [params["w_ihT"][l], params["b"][l]]
        in_specs += [
            pl.BlockSpec((H, 4 * H), lambda g: (0, 0)),
            pl.BlockSpec((1, 4 * H), lambda g: (0, 0)),
        ]
    flat_inputs += [params["fc_wT"], params["fc_b"]]
    in_specs += [
        pl.BlockSpec((2 * L * H, embed_size), lambda g: (0, 0)),
        pl.BlockSpec((1, embed_size), lambda g: (0, 0)),
    ]

    scratch_shapes = []
    if L > 1:
        scratch_shapes.append(pltpu.VMEM((S, bb, 4 * H), jnp.float32))

    kernel = _make_question_encoder_kernel(L, S, bb, H)

    out = pl.pallas_call(
        kernel,
        out_shape=jax.ShapeDtypeStruct((B_pad, embed_size), jnp.float32),
        grid=(G,),
        in_specs=in_specs,
        out_specs=pl.BlockSpec((bb, embed_size), lambda g: (g, 0)),
        scratch_shapes=tuple(scratch_shapes),
        compiler_params=pltpu.CompilerParams(
            dimension_semantics=("parallel",),
            vmem_limit_bytes=_vmem_limit_bytes(S, bb, H, L, embed_size)),
    )(*flat_inputs)
    return out[:B]


# --------------------------- pure-JAX reference ------------------------------

def question_encoder_reference(question, params, *, num_layers, hidden_size):
    H = hidden_size
    emb = jnp.take(params["embedding"], question, axis=0)            # (B, S, E)
    x = jnp.tanh(emb).transpose(1, 0, 2)                             # (S, B, E)
    S, B, _ = x.shape
    inp = x
    h_list, c_list = [], []
    for l in range(num_layers):
        w_ihT = params["w_ihT"][l]
        w_hhT = params["w_hhT"][l]
        b = params["b"][l]
        h = jnp.zeros((B, H), jnp.float32)
        c = jnp.zeros((B, H), jnp.float32)
        outs = []
        for t in range(S):
            gates = inp[t] @ w_ihT + h @ w_hhT + b
            i_g = jax.nn.sigmoid(gates[:, 0 * H:1 * H])
            f_g = jax.nn.sigmoid(gates[:, 1 * H:2 * H])
            g_g = jnp.tanh(gates[:, 2 * H:3 * H])
            o_g = jax.nn.sigmoid(gates[:, 3 * H:4 * H])
            c = f_g * c + i_g * g_g
            h = o_g * jnp.tanh(c)
            outs.append(h)
        inp = jnp.stack(outs, axis=0)
        h_list.append(h)
        c_list.append(c)
    feat = jnp.concatenate(
        [arr for pair in zip(h_list, c_list) for arr in pair], axis=1)
    feat = jnp.tanh(feat)
    return feat @ params["fc_wT"] + params["fc_b"]


# --------------------------------- main --------------------------------------

if __name__ == "__main__":
    # Module hyper-parameters (small, consistent with the PyTorch module).
    qst_vocab_size = 50
    word_embed_size = 32
    hidden_size = 32
    num_layers = 2
    embed_size = 32
    batch = 8
    seq_len = 8

    key = jax.random.PRNGKey(0)
    keys = jax.random.split(key, 4 + 3 * num_layers)
    k_it = iter(keys)

    # Deterministic synthetic parameters (mirror nn.Module shapes; transposed so the
    # kernel does x @ W^T as plain row-major matmuls; b = b_ih + b_hh folded).
    params = {
        "embedding": 0.1 * jax.random.normal(
            next(k_it), (qst_vocab_size, word_embed_size), jnp.float32),
        "w_ihT": [],
        "w_hhT": [],
        "b": [],
    }
    for l in range(num_layers):
        in_dim = word_embed_size if l == 0 else hidden_size
        params["w_ihT"].append(0.1 * jax.random.normal(
            next(k_it), (in_dim, 4 * hidden_size), jnp.float32))
        params["w_hhT"].append(0.1 * jax.random.normal(
            next(k_it), (hidden_size, 4 * hidden_size), jnp.float32))
        params["b"].append(0.1 * jax.random.normal(
            next(k_it), (1, 4 * hidden_size), jnp.float32))
    params["fc_wT"] = 0.1 * jax.random.normal(
        next(k_it), (2 * num_layers * hidden_size, embed_size), jnp.float32)
    params["fc_b"] = 0.1 * jax.random.normal(
        next(k_it), (1, embed_size), jnp.float32)

    question = jax.random.randint(
        next(k_it), (batch, seq_len), 0, qst_vocab_size, dtype=jnp.int32)

    run = functools.partial(question_encoder_pallas,
                            num_layers=num_layers,
                            hidden_size=hidden_size,
                            embed_size=embed_size)
    out = jax.block_until_ready(run(question, params))

    ref = jax.block_until_ready(
        question_encoder_reference(question, params,
                                   num_layers=num_layers,
                                   hidden_size=hidden_size))

    assert out.shape == (batch, embed_size), out.shape
    # bf16 MXU operands with f32 accumulation -> slightly looser tolerance than pure f32.
    np.testing.assert_allclose(np.asarray(out), np.asarray(ref),
                               rtol=5e-3, atol=5e-3)
    print("KERNEL_OK")
</pallas_src>

<mosaic_0001>
module attributes {stable_mosaic.version = 11 : i64} {
  func.func @kernel(%arg0: i32, %arg1: memref<8x8x128xf32, #tpu.memory_space<vmem>>, %arg2: memref<32x128xf32, #tpu.memory_space<vmem>>, %arg3: memref<32x128xf32, #tpu.memory_space<vmem>>, %arg4: memref<32x128xf32, #tpu.memory_space<vmem>>, %arg5: memref<1x128xf32, #tpu.memory_space<vmem>>, %arg6: memref<128x32xf32, #tpu.memory_space<vmem>>, %arg7: memref<1x32xf32, #tpu.memory_space<vmem>>, %arg8: memref<8x32xf32, #tpu.memory_space<vmem>>, %arg9: memref<8x8x128xf32, #tpu.memory_space<vmem>>) attributes {dimension_semantics = [#tpu.dimension_semantics<parallel>], iteration_bounds = array<i64: 1>, scalar_prefetch = 0 : i64, scratch_operands = 1 : i64, tpu.core_type = #tpu.core_type<tc>, window_params = [{transform_indices = @transform_0, window_bounds = array<i64: 8, 8, 128>}, {pipeline_mode = #tpu.pipeline_mode<synchronous>, transform_indices = @transform_1, window_bounds = array<i64: 32, 128>}, {pipeline_mode = #tpu.pipeline_mode<synchronous>, transform_indices = @transform_2, window_bounds = array<i64: 32, 128>}, {pipeline_mode = #tpu.pipeline_mode<synchronous>, transform_indices = @transform_3, window_bounds = array<i64: 32, 128>}, {pipeline_mode = #tpu.pipeline_mode<synchronous>, transform_indices = @transform_4, window_bounds = array<i64: 1, 128>}, {pipeline_mode = #tpu.pipeline_mode<synchronous>, transform_indices = @transform_5, window_bounds = array<i64: 128, 32>}, {pipeline_mode = #tpu.pipeline_mode<synchronous>, transform_indices = @transform_6, window_bounds = array<i64: 1, 32>}, {transform_indices = @transform_7, window_bounds = array<i64: 8, 32>}]} {
    %c0 = arith.constant 0 : index
    %c0_0 = arith.constant 0 : index
    %0 = vector.load %arg2[%c0, %c0_0] : memref<32x128xf32, #tpu.memory_space<vmem>>, vector<32x128xf32>
    %1 = arith.truncf %0 : vector<32x128xf32> to vector<32x128xbf16>
    %c0_1 = arith.constant 0 : index
    %c0_2 = arith.constant 0 : index
    %2 = vector.load %arg4[%c0_1, %c0_2] : memref<32x128xf32, #tpu.memory_space<vmem>>, vector<32x128xf32>
    %3 = arith.truncf %2 : vector<32x128xf32> to vector<32x128xbf16>
    %c0_3 = arith.constant 0 : index
    %c0_4 = arith.constant 0 : index
    %4 = vector.load %arg5[%c0_3, %c0_4] : memref<1x128xf32, #tpu.memory_space<vmem>>, vector<1x128xf32>
    %5 = vector.shape_cast %4 : vector<1x128xf32> to vector<1x128xf32>
    %6 = vector.broadcast %5 : vector<1x128xf32> to vector<8x128xf32>
    %cst = arith.constant 0.000000e+00 : f32
    %7 = vector.broadcast %cst : f32 to vector<8x32xf32>
    %cst_5 = arith.constant 0.000000e+00 : f32
    %8 = vector.broadcast %cst_5 : f32 to vector<8x32xf32>
    %c0_6 = arith.constant 0 : index
    %c0_7 = arith.constant 0 : index
    %c0_8 = arith.constant 0 : index
    %9 = vector.load %arg1[%c0_6, %c0_7, %c0_8] : memref<8x8x128xf32, #tpu.memory_space<vmem>>, vector<1x8x128xf32>
    %10 = vector.shape_cast %9 : vector<1x8x128xf32> to vector<8x128xf32>
    %11 = arith.truncf %7 : vector<8x32xf32> to vector<8x32xbf16>
    %cst_9 = arith.constant dense<0.000000e+00> : vector<8x128xf32>
    %12 = tpu.matmul %11, %1, %cst_9 {dimension_numbers = #tpu.dot_dimension_numbers<[1], [0], [0], [1], [0, 0, 1, 1], [], []>} : vector<8x32xbf16>, vector<32x128xbf16>, vector<8x128xf32> -> vector<8x128xf32>
    %13 = arith.addf %10, %12 : vector<8x128xf32>
    %14 = arith.negf %13 : vector<8x128xf32>
    %15 = math.exp %14 : vector<8x128xf32>
    %cst_10 = arith.constant 1.000000e+00 : f32
    %16 = vector.broadcast %cst_10 : f32 to vector<8x128xf32>
    %17 = arith.addf %16, %15 : vector<8x128xf32>
    %18 = arith.divf %16, %17 : vector<8x128xf32>
    %19 = math.tanh %13 : vector<8x128xf32>
    %20 = vector.extract_strided_slice %18 {offsets = [0, 0], sizes = [8, 32], strides = [1, 1]} : vector<8x128xf32> to vector<8x32xf32>
    %21 = vector.extract_strided_slice %18 {offsets = [0, 32], sizes = [8, 32], strides = [1, 1]} : vector<8x128xf32> to vector<8x32xf32>
    %22 = vector.extract_strided_slice %18 {offsets = [0, 96], sizes = [8, 32], strides = [1, 1]} : vector<8x128xf32> to vector<8x32xf32>
    %23 = vector.extract_strided_slice %19 {offsets = [0, 64], sizes = [8, 32], strides = [1, 1]} : vector<8x128xf32> to vector<8x32xf32>
    %24 = arith.mulf %21, %8 : vector<8x32xf32>
    %25 = arith.mulf %20, %23 : vector<8x32xf32>
    %26 = arith.addf %24, %25 : vector<8x32xf32>
    %27 = math.tanh %26 : vector<8x32xf32>
    %28 = arith.mulf %22, %27 : vector<8x32xf32>
    %29 = arith.truncf %28 : vector<8x32xf32> to vector<8x32xbf16>
    %cst_11 = arith.constant dense<0.000000e+00> : vector<8x128xf32>
    %30 = tpu.matmul %29, %3, %cst_11 {dimension_numbers = #tpu.dot_dimension_numbers<[1], [0], [0], [1], [0, 0, 1, 1], [], []>} : vector<8x32xbf16>, vector<32x128xbf16>, vector<8x128xf32> -> vector<8x128xf32>
    %31 = arith.addf %30, %6 : vector<8x128xf32>
    %c0_12 = arith.constant 0 : index
    %c0_13 = arith.constant 0 : index
    %c0_14 = arith.constant 0 : index
    %32 = vector.load %arg9[%c0_12, %c0_13, %c0_14] : memref<8x8x128xf32, #tpu.memory_space<vmem>>, vector<1x8x128xf32>
    %33 = vector.shape_cast %32 : vector<1x8x128xf32> to vector<8x128xf32>
    %34 = vector.shape_cast %31 : vector<8x128xf32> to vector<1x8x128xf32>
    tpu.vector_store %arg9[%c0_12, %c0_13, %c0_14], %34 {strides = array<i32>} : memref<8x8x128xf32, #tpu.memory_space<vmem>>, vector<1x8x128xf32>,
    %c1 = arith.constant 1 : index
    %c0_15 = arith.constant 0 : index
    %c0_16 = arith.constant 0 : index
    %35 = vector.load %arg1[%c1, %c0_15, %c0_16] : memref<8x8x128xf32, #tpu.memory_space<vmem>>, vector<1x8x128xf32>
    %36 = vector.shape_cast %35 : vector<1x8x128xf32> to vector<8x128xf32>
    %37 = arith.truncf %28 : vector<8x32xf32> to vector<8x32xbf16>
    %cst_17 = arith.constant dense<0.000000e+00> : vector<8x128xf32>
    %38 = tpu.matmul %37, %1, %cst_17 {dimension_numbers = #tpu.dot_dimension_numbers<[1], [0], [0], [1], [0, 0, 1, 1], [], []>} : vector<8x32xbf16>, vector<32x128xbf16>, vector<8x128xf32> -> vector<8x128xf32>
    %39 = arith.addf %36, %38 : vector<8x128xf32>
    %40 = arith.negf %39 : vector<8x128xf32>
    %41 = math.exp %40 : vector<8x128xf32>
    %cst_18 = arith.constant 1.000000e+00 : f32
    %42 = vector.broadcast %cst_18 : f32 to vector<8x128xf32>
    %43 = arith.addf %42, %41 : vector<8x128xf32>
    %44 = arith.divf %42, %43 : vector<8x128xf32>
    %45 = math.tanh %39 : vector<8x128xf32>
    %46 = vector.extract_strided_slice %44 {offsets = [0, 0], sizes = [8, 32], strides = [1, 1]} : vector<8x128xf32> to vector<8x32xf32>
    %47 = vector.extract_strided_slice %44 {offsets = [0, 32], sizes = [8, 32], strides = [1, 1]} : vector<8x128xf32> to vector<8x32xf32>
    %48 = vector.extract_strided_slice %44 {offsets = [0, 96], sizes = [8, 32], strides = [1, 1]} : vector<8x128xf32> to vector<8x32xf32>
    %49 = vector.extract_strided_slice %45 {offsets = [0, 64], sizes = [8, 32], strides = [1, 1]} : vector<8x128xf32> to vector<8x32xf32>
    %50 = arith.mulf %47, %26 : vector<8x32xf32>
    %51 = arith.mulf %46, %49 : vector<8x32xf32>
    %52 = arith.addf %50, %51 : vector<8x32xf32>
    %53 = math.tanh %52 : vector<8x32xf32>
    %54 = arith.mulf %48, %53 : vector<8x32xf32>
    %55 = arith.truncf %54 : vector<8x32xf32> to vector<8x32xbf16>
    %cst_19 = arith.constant dense<0.000000e+00> : vector<8x128xf32>
    %56 = tpu.matmul %55, %3, %cst_19 {dimension_numbers = #tpu.dot_dimension_numbers<[1], [0], [0], [1], [0, 0, 1, 1], [], []>} : vector<8x32xbf16>, vector<32x128xbf16>, vector<8x128xf32> -> vector<8x128xf32>
    %57 = arith.addf %56, %6 : vector<8x128xf32>
    %c1_20 = arith.constant 1 : index
    %c0_21 = arith.constant 0 : index
    %c0_22 = arith.constant 0 : index
    %58 = vector.load %arg9[%c1_20, %c0_21, %c0_22] : memref<8x8x128xf32, #tpu.memory_space<vmem>>, vector<1x8x128xf32>
    %59 = vector.shape_cast %58 : vector<1x8x128xf32> to vector<8x128xf32>
    %60 = vector.shape_cast %57 : vector<8x128xf32> to vector<1x8x128xf32>
    tpu.vector_store %arg9[%c1_20, %c0_21, %c0_22], %60 {strides = array<i32>} : memref<8x8x128xf32, #tpu.memory_space<vmem>>, vector<1x8x128xf32>,
    %c2 = arith.constant 2 : index
    %c0_23 = arith.constant 0 : index
    %c0_24 = arith.constant 0 : index
    %61 = vector.load %arg1[%c2, %c0_23, %c0_24] : memref<8x8x128xf32, #tpu.memory_space<vmem>>, vector<1x8x128xf32>
    %62 = vector.shape_cast %61 : vector<1x8x128xf32> to vector<8x128xf32>
    %63 = arith.truncf %54 : vector<8x32xf32> to vector<8x32xbf16>
    %cst_25 = arith.constant dense<0.000000e+00> : vector<8x128xf32>
    %64 = tpu.matmul %63, %1, %cst_25 {dimension_numbers = #tpu.dot_dimension_numbers<[1], [0], [0], [1], [0, 0, 1, 1], [], []>} : vector<8x32xbf16>, vector<32x128xbf16>, vector<8x128xf32> -> vector<8x128xf32>
    %65 = arith.addf %62, %64 : vector<8x128xf32>
    %66 = arith.negf %65 : vector<8x128xf32>
    %67 = math.exp %66 : vector<8x128xf32>
    %cst_26 = arith.constant 1.000000e+00 : f32
    %68 = vector.broadcast %cst_26 : f32 to vector<8x128xf32>
    %69 = arith.addf %68, %67 : vector<8x128xf32>
    %70 = arith.divf %68, %69 : vector<8x128xf32>
    %71 = math.tanh %65 : vector<8x128xf32>
    %72 = vector.extract_strided_slice %70 {offsets = [0, 0], sizes = [8, 32], strides = [1, 1]} : vector<8x128xf32> to vector<8x32xf32>
    %73 = vector.extract_strided_slice %70 {offsets = [0, 32], sizes = [8, 32], strides = [1, 1]} : vector<8x128xf32> to vector<8x32xf32>
    %74 = vector.extract_strided_slice %70 {offsets = [0, 96], sizes = [8, 32], strides = [1, 1]} : vector<8x128xf32> to vector<8x32xf32>
    %75 = vector.extract_strided_slice %71 {offsets = [0, 64], sizes = [8, 32], strides = [1, 1]} : vector<8x128xf32> to vector<8x32xf32>
    %76 = arith.mulf %73, %52 : vector<8x32xf32>
    %77 = arith.mulf %72, %75 : vector<8x32xf32>
    %78 = arith.addf %76, %77 : vector<8x32xf32>
    %79 = math.tanh %78 : vector<8x32xf32>
    %80 = arith.mulf %74, %79 : vector<8x32xf32>
    %81 = arith.truncf %80 : vector<8x32xf32> to vector<8x32xbf16>
    %cst_27 = arith.constant dense<0.000000e+00> : vector<8x128xf32>
    %82 = tpu.matmul %81, %3, %cst_27 {dimension_numbers = #tpu.dot_dimension_numbers<[1], [0], [0], [1], [0, 0, 1, 1], [], []>} : vector<8x32xbf16>, vector<32x128xbf16>, vector<8x128xf32> -> vector<8x128xf32>
    %83 = arith.addf %82, %6 : vector<8x128xf32>
    %c2_28 = arith.constant 2 : index
    %c0_29 = arith.constant 0 : index
    %c0_30 = arith.constant 0 : index
    %84 = vector.load %arg9[%c2_28, %c0_29, %c0_30] : memref<8x8x128xf32, #tpu.memory_space<vmem>>, vector<1x8x128xf32>
    %85 = vector.shape_cast %84 : vector<1x8x128xf32> to vector<8x128xf32>
    %86 = vector.shape_cast %83 : vector<8x128xf32> to vector<1x8x128xf32>
    tpu.vector_store %arg9[%c2_28, %c0_29, %c0_30], %86 {strides = array<i32>} : memref<8x8x128xf32, #tpu.memory_space<vmem>>, vector<1x8x128xf32>,
    %c3 = arith.constant 3 : index
    %c0_31 = arith.constant 0 : index
    %c0_32 = arith.constant 0 : index
    %87 = vector.load %arg1[%c3, %c0_31, %c0_32] : memref<8x8x128xf32, #tpu.memory_space<vmem>>, vector<1x8x128xf32>
    %88 = vector.shape_cast %87 : vector<1x8x128xf32> to vector<8x128xf32>
    %89 = arith.truncf %80 : vector<8x32xf32> to vector<8x32xbf16>
    %cst_33 = arith.constant dense<0.000000e+00> : vector<8x128xf32>
    %90 = tpu.matmul %89, %1, %cst_33 {dimension_numbers = #tpu.dot_dimension_numbers<[1], [0], [0], [1], [0, 0, 1, 1], [], []>} : vector<8x32xbf16>, vector<32x128xbf16>, vector<8x128xf32> -> vector<8x128xf32>
    %91 = arith.addf %88, %90 : vector<8x128xf32>
    %92 = arith.negf %91 : vector<8x128xf32>
    %93 = math.exp %92 : vector<8x128xf32>
    %cst_34 = arith.constant 1.000000e+00 : f32
    %94 = vector.broadcast %cst_34 : f32 to vector<8x128xf32>
    %95 = arith.addf %94, %93 : vector<8x128xf32>
    %96 = arith.divf %94, %95 : vector<8x128xf32>
    %97 = math.tanh %91 : vector<8x128xf32>
    %98 = vector.extract_strided_slice %96 {offsets = [0, 0], sizes = [8, 32], strides = [1, 1]} : vector<8x128xf32> to vector<8x32xf32>
    %99 = vector.extract_strided_slice %96 {offsets = [0, 32], sizes = [8, 32], strides = [1, 1]} : vector<8x128xf32> to vector<8x32xf32>
    %100 = vector.extract_strided_slice %96 {offsets = [0, 96], sizes = [8, 32], strides = [1, 1]} : vector<8x128xf32> to vector<8x32xf32>
    %101 = vector.extract_strided_slice %97 {offsets = [0, 64], sizes = [8, 32], strides = [1, 1]} : vector<8x128xf32> to vector<8x32xf32>
    %102 = arith.mulf %99, %78 : vector<8x32xf32>
    %103 = arith.mulf %98, %101 : vector<8x32xf32>
    %104 = arith.addf %102, %103 : vector<8x32xf32>
    %105 = math.tanh %104 : vector<8x32xf32>
    %106 = arith.mulf %100, %105 : vector<8x32xf32>
    %107 = arith.truncf %106 : vector<8x32xf32> to vector<8x32xbf16>
    %cst_35 = arith.constant dense<0.000000e+00> : vector<8x128xf32>
    %108 = tpu.matmul %107, %3, %cst_35 {dimension_numbers = #tpu.dot_dimension_numbers<[1], [0], [0], [1], [0, 0, 1, 1], [], []>} : vector<8x32xbf16>, vector<32x128xbf16>, vector<8x128xf32> -> vector<8x128xf32>
    %109 = arith.addf %108, %6 : vector<8x128xf32>
    %c3_36 = arith.constant 3 : index
    %c0_37 = arith.constant 0 : index
    %c0_38 = arith.constant 0 : index
    %110 = vector.load %arg9[%c3_36, %c0_37, %c0_38] : memref<8x8x128xf32, #tpu.memory_space<vmem>>, vector<1x8x128xf32>
    %111 = vector.shape_cast %110 : vector<1x8x128xf32> to vector<8x128xf32>
    %112 = vector.shape_cast %109 : vector<8x128xf32> to vector<1x8x128xf32>
    tpu.vector_store %arg9[%c3_36, %c0_37, %c0_38], %112 {strides = array<i32>} : memref<8x8x128xf32, #tpu.memory_space<vmem>>, vector<1x8x128xf32>,
    %c4 = arith.constant 4 : index
    %c0_39 = arith.constant 0 : index
    %c0_40 = arith.constant 0 : index
    %113 = vector.load %arg1[%c4, %c0_39, %c0_40] : memref<8x8x128xf32, #tpu.memory_space<vmem>>, vector<1x8x128xf32>
    %114 = vector.shape_cast %113 : vector<1x8x128xf32> to vector<8x128xf32>
    %115 = arith.truncf %106 : vector<8x32xf32> to vector<8x32xbf16>
    %cst_41 = arith.constant dense<0.000000e+00> : vector<8x128xf32>
    %116 = tpu.matmul %115, %1, %cst_41 {dimension_numbers = #tpu.dot_dimension_numbers<[1], [0], [0], [1], [0, 0, 1, 1], [], []>} : vector<8x32xbf16>, vector<32x128xbf16>, vector<8x128xf32> -> vector<8x128xf32>
    %117 = arith.addf %114, %116 : vector<8x128xf32>
    %118 = arith.negf %117 : vector<8x128xf32>
    %119 = math.exp %118 : vector<8x128xf32>
    %cst_42 = arith.constant 1.000000e+00 : f32
    %120 = vector.broadcast %cst_42 : f32 to vector<8x128xf32>
    %121 = arith.addf %120, %119 : vector<8x128xf32>
    %122 = arith.divf %120, %121 : vector<8x128xf32>
    %123 = math.tanh %117 : vector<8x128xf32>
    %124 = vector.extract_strided_slice %122 {offsets = [0, 0], sizes = [8, 32], strides = [1, 1]} : vector<8x128xf32> to vector<8x32xf32>
    %125 = vector.extract_strided_slice %122 {offsets = [0, 32], sizes = [8, 32], strides = [1, 1]} : vector<8x128xf32> to vector<8x32xf32>
    %126 = vector.extract_strided_slice %122 {offsets = [0, 96], sizes = [8, 32], strides = [1, 1]} : vector<8x128xf32> to vector<8x32xf32>
    %127 = vector.extract_strided_slice %123 {offsets = [0, 64], sizes = [8, 32], strides = [1, 1]} : vector<8x128xf32> to vector<8x32xf32>
    %128 = arith.mulf %125, %104 : vector<8x32xf32>
    %129 = arith.mulf %124, %127 : vector<8x32xf32>
    %130 = arith.addf %128, %129 : vector<8x32xf32>
    %131 = math.tanh %130 : vector<8x32xf32>
    %132 = arith.mulf %126, %131 : vector<8x32xf32>
    %133 = arith.truncf %132 : vector<8x32xf32> to vector<8x32xbf16>
    %cst_43 = arith.constant dense<0.000000e+00> : vector<8x128xf32>
    %134 = tpu.matmul %133, %3, %cst_43 {dimension_numbers = #tpu.dot_dimension_numbers<[1], [0], [0], [1], [0, 0, 1, 1], [], []>} : vector<8x32xbf16>, vector<32x128xbf16>, vector<8x128xf32> -> vector<8x128xf32>
    %135 = arith.addf %134, %6 : vector<8x128xf32>
    %c4_44 = arith.constant 4 : index
    %c0_45 = arith.constant 0 : index
    %c0_46 = arith.constant 0 : index
    %136 = vector.load %arg9[%c4_44, %c0_45, %c0_46] : memref<8x8x128xf32, #tpu.memory_space<vmem>>, vector<1x8x128xf32>
    %137 = vector.shape_cast %136 : vector<1x8x128xf32> to vector<8x128xf32>
    %138 = vector.shape_cast %135 : vector<8x128xf32> to vector<1x8x128xf32>
    tpu.vector_store %arg9[%c4_44, %c0_45, %c0_46], %138 {strides = array<i32>} : memref<8x8x128xf32, #tpu.memory_space<vmem>>, vector<1x8x128xf32>,
    %c5 = arith.constant 5 : index
    %c0_47 = arith.constant 0 : index
    %c0_48 = arith.constant 0 : index
    %139 = vector.load %arg1[%c5, %c0_47, %c0_48] : memref<8x8x128xf32, #tpu.memory_space<vmem>>, vector<1x8x128xf32>
    %140 = vector.shape_cast %139 : vector<1x8x128xf32> to vector<8x128xf32>
    %141 = arith.truncf %132 : vector<8x32xf32> to vector<8x32xbf16>
    %cst_49 = arith.constant dense<0.000000e+00> : vector<8x128xf32>
    %142 = tpu.matmul %141, %1, %cst_49 {dimension_numbers = #tpu.dot_dimension_numbers<[1], [0], [0], [1], [0, 0, 1, 1], [], []>} : vector<8x32xbf16>, vector<32x128xbf16>, vector<8x128xf32> -> vector<8x128xf32>
    %143 = arith.addf %140, %142 : vector<8x128xf32>
    %144 = arith.negf %143 : vector<8x128xf32>
    %145 = math.exp %144 : vector<8x128xf32>
    %cst_50 = arith.constant 1.000000e+00 : f32
    %146 = vector.broadcast %cst_50 : f32 to vector<8x128xf32>
    %147 = arith.addf %146, %145 : vector<8x128xf32>
    %148 = arith.divf %146, %147 : vector<8x128xf32>
    %149 = math.tanh %143 : vector<8x128xf32>
    %150 = vector.extract_strided_slice %148 {offsets = [0, 0], sizes = [8, 32], strides = [1, 1]} : vector<8x128xf32> to vector<8x32xf32>
    %151 = vector.extract_strided_slice %148 {offsets = [0, 32], sizes = [8, 32], strides = [1, 1]} : vector<8x128xf32> to vector<8x32xf32>
    %152 = vector.extract_strided_slice %148 {offsets = [0, 96], sizes = [8, 32], strides = [1, 1]} : vector<8x128xf32> to vector<8x32xf32>
    %153 = vector.extract_strided_slice %149 {offsets = [0, 64], sizes = [8, 32], strides = [1, 1]} : vector<8x128xf32> to vector<8x32xf32>
    %154 = arith.mulf %151, %130 : vector<8x32xf32>
    %155 = arith.mulf %150, %153 : vector<8x32xf32>
    %156 = arith.addf %154, %155 : vector<8x32xf32>
    %157 = math.tanh %156 : vector<8x32xf32>
    %158 = arith.mulf %152, %157 : vector<8x32xf32>
    %159 = arith.truncf %158 : vector<8x32xf32> to vector<8x32xbf16>
    %cst_51 = arith.constant dense<0.000000e+00> : vector<8x128xf32>
    %160 = tpu.matmul %159, %3, %cst_51 {dimension_numbers = #tpu.dot_dimension_numbers<[1], [0], [0], [1], [0, 0, 1, 1], [], []>} : vector<8x32xbf16>, vector<32x128xbf16>, vector<8x128xf32> -> vector<8x128xf32>
    %161 = arith.addf %160, %6 : vector<8x128xf32>
    %c5_52 = arith.constant 5 : index
    %c0_53 = arith.constant 0 : index
    %c0_54 = arith.constant 0 : index
    %162 = vector.load %arg9[%c5_52, %c0_53, %c0_54] : memref<8x8x128xf32, #tpu.memory_space<vmem>>, vector<1x8x128xf32>
    %163 = vector.shape_cast %162 : vector<1x8x128xf32> to vector<8x128xf32>
    %164 = vector.shape_cast %161 : vector<8x128xf32> to vector<1x8x128xf32>
    tpu.vector_store %arg9[%c5_52, %c0_53, %c0_54], %164 {strides = array<i32>} : memref<8x8x128xf32, #tpu.memory_space<vmem>>, vector<1x8x128xf32>,
    %c6 = arith.constant 6 : index
    %c0_55 = arith.constant 0 : index
    %c0_56 = arith.constant 0 : index
    %165 = vector.load %arg1[%c6, %c0_55, %c0_56] : memref<8x8x128xf32, #tpu.memory_space<vmem>>, vector<1x8x128xf32>
    %166 = vector.shape_cast %165 : vector<1x8x128xf32> to vector<8x128xf32>
    %167 = arith.truncf %158 : vector<8x32xf32> to vector<8x32xbf16>
    %cst_57 = arith.constant dense<0.000000e+00> : vector<8x128xf32>
    %168 = tpu.matmul %167, %1, %cst_57 {dimension_numbers = #tpu.dot_dimension_numbers<[1], [0], [0], [1], [0, 0, 1, 1], [], []>} : vector<8x32xbf16>, vector<32x128xbf16>, vector<8x128xf32> -> vector<8x128xf32>
    %169 = arith.addf %166, %168 : vector<8x128xf32>
    %170 = arith.negf %169 : vector<8x128xf32>
    %171 = math.exp %170 : vector<8x128xf32>
    %cst_58 = arith.constant 1.000000e+00 : f32
    %172 = vector.broadcast %cst_58 : f32 to vector<8x128xf32>
    %173 = arith.addf %172, %171 : vector<8x128xf32>
    %174 = arith.divf %172, %173 : vector<8x128xf32>
    %175 = math.tanh %169 : vector<8x128xf32>
    %176 = vector.extract_strided_slice %174 {offsets = [0, 0], sizes = [8, 32], strides = [1, 1]} : vector<8x128xf32> to vector<8x32xf32>
    %177 = vector.extract_strided_slice %174 {offsets = [0, 32], sizes = [8, 32], strides = [1, 1]} : vector<8x128xf32> to vector<8x32xf32>
    %178 = vector.extract_strided_slice %174 {offsets = [0, 96], sizes = [8, 32], strides = [1, 1]} : vector<8x128xf32> to vector<8x32xf32>
    %179 = vector.extract_strided_slice %175 {offsets = [0, 64], sizes = [8, 32], strides = [1, 1]} : vector<8x128xf32> to vector<8x32xf32>
    %180 = arith.mulf %177, %156 : vector<8x32xf32>
    %181 = arith.mulf %176, %179 : vector<8x32xf32>
    %182 = arith.addf %180, %181 : vector<8x32xf32>
    %183 = math.tanh %182 : vector<8x32xf32>
    %184 = arith.mulf %178, %183 : vector<8x32xf32>
    %185 = arith.truncf %184 : vector<8x32xf32> to vector<8x32xbf16>
    %cst_59 = arith.constant dense<0.000000e+00> : vector<8x128xf32>
    %186 = tpu.matmul %185, %3, %cst_59 {dimension_numbers = #tpu.dot_dimension_numbers<[1], [0], [0], [1], [0, 0, 1, 1], [], []>} : vector<8x32xbf16>, vector<32x128xbf16>, vector<8x128xf32> -> vector<8x128xf32>
    %187 = arith.addf %186, %6 : vector<8x128xf32>
    %c6_60 = arith.constant 6 : index
    %c0_61 = arith.constant 0 : index
    %c0_62 = arith.constant 0 : index
    %188 = vector.load %arg9[%c6_60, %c0_61, %c0_62] : memref<8x8x128xf32, #tpu.memory_space<vmem>>, vector<1x8x128xf32>
    %189 = vector.shape_cast %188 : vector<1x8x128xf32> to vector<8x128xf32>
    %190 = vector.shape_cast %187 : vector<8x128xf32> to vector<1x8x128xf32>
    tpu.vector_store %arg9[%c6_60, %c0_61, %c0_62], %190 {strides = array<i32>} : memref<8x8x128xf32, #tpu.memory_space<vmem>>, vector<1x8x128xf32>,
    %c7 = arith.constant 7 : index
    %c0_63 = arith.constant 0 : index
    %c0_64 = arith.constant 0 : index
    %191 = vector.load %arg1[%c7, %c0_63, %c0_64] : memref<8x8x128xf32, #tpu.memory_space<vmem>>, vector<1x8x128xf32>
    %192 = vector.shape_cast %191 : vector<1x8x128xf32> to vector<8x128xf32>
    %193 = arith.truncf %184 : vector<8x32xf32> to vector<8x32xbf16>
    %cst_65 = arith.constant dense<0.000000e+00> : vector<8x128xf32>
    %194 = tpu.matmul %193, %1, %cst_65 {dimension_numbers = #tpu.dot_dimension_numbers<[1], [0], [0], [1], [0, 0, 1, 1], [], []>} : vector<8x32xbf16>, vector<32x128xbf16>, vector<8x128xf32> -> vector<8x128xf32>
    %195 = arith.addf %192, %194 : vector<8x128xf32>
    %196 = arith.negf %195 : vector<8x128xf32>
    %197 = math.exp %196 : vector<8x128xf32>
    %cst_66 = arith.constant 1.000000e+00 : f32
    %198 = vector.broadcast %cst_66 : f32 to vector<8x128xf32>
    %199 = arith.addf %198, %197 : vector<8x128xf32>
    %200 = arith.divf %198, %199 : vector<8x128xf32>
    %201 = math.tanh %195 : vector<8x128xf32>
    %202 = vector.extract_strided_slice %200 {offsets = [0, 0], sizes = [8, 32], strides = [1, 1]} : vector<8x128xf32> to vector<8x32xf32>
    %203 = vector.extract_strided_slice %200 {offsets = [0, 32], sizes = [8, 32], strides = [1, 1]} : vector<8x128xf32> to vector<8x32xf32>
    %204 = vector.extract_strided_slice %200 {offsets = [0, 96], sizes = [8, 32], strides = [1, 1]} : vector<8x128xf32> to vector<8x32xf32>
    %205 = vector.extract_strided_slice %201 {offsets = [0, 64], sizes = [8, 32], strides = [1, 1]} : vector<8x128xf32> to vector<8x32xf32>
    %206 = arith.mulf %203, %182 : vector<8x32xf32>
    %207 = arith.mulf %202, %205 : vector<8x32xf32>
    %208 = arith.addf %206, %207 : vector<8x32xf32>
    %209 = math.tanh %208 : vector<8x32xf32>
    %210 = arith.mulf %204, %209 : vector<8x32xf32>
    %211 = arith.truncf %210 : vector<8x32xf32> to vector<8x32xbf16>
    %cst_67 = arith.constant dense<0.000000e+00> : vector<8x128xf32>
    %212 = tpu.matmul %211, %3, %cst_67 {dimension_numbers = #tpu.dot_dimension_numbers<[1], [0], [0], [1], [0, 0, 1, 1], [], []>} : vector<8x32xbf16>, vector<32x128xbf16>, vector<8x128xf32> -> vector<8x128xf32>
    %213 = arith.addf %212, %6 : vector<8x128xf32>
    %c7_68 = arith.constant 7 : index
    %c0_69 = arith.constant 0 : index
    %c0_70 = arith.constant 0 : index
    %214 = vector.load %arg9[%c7_68, %c0_69, %c0_70] : memref<8x8x128xf32, #tpu.memory_space<vmem>>, vector<1x8x128xf32>
    %215 = vector.shape_cast %214 : vector<1x8x128xf32> to vector<8x128xf32>
    %216 = vector.shape_cast %213 : vector<8x128xf32> to vector<1x8x128xf32>
    tpu.vector_store %arg9[%c7_68, %c0_69, %c0_70], %216 {strides = array<i32>} : memref<8x8x128xf32, #tpu.memory_space<vmem>>, vector<1x8x128xf32>,
    %c0_71 = arith.constant 0 : index
    %c0_72 = arith.constant 0 : index
    %217 = vector.load %arg3[%c0_71, %c0_72] : memref<32x128xf32, #tpu.memory_space<vmem>>, vector<32x128xf32>
    %218 = arith.truncf %217 : vector<32x128xf32> to vector<32x128xbf16>
    %cst_73 = arith.constant 0.000000e+00 : f32
    %219 = vector.broadcast %cst_73 : f32 to vector<8x32xf32>
    %cst_74 = arith.constant 0.000000e+00 : f32
    %220 = vector.broadcast %cst_74 : f32 to vector<8x32xf32>
    %c0_75 = arith.constant 0 : index
    %c0_76 = arith.constant 0 : index
    %c0_77 = arith.constant 0 : index
    %221 = vector.load %arg9[%c0_75, %c0_76, %c0_77] : memref<8x8x128xf32, #tpu.memory_space<vmem>>, vector<1x8x128xf32>
    %222 = vector.shape_cast %221 : vector<1x8x128xf32> to vector<8x128xf32>
    %223 = arith.truncf %219 : vector<8x32xf32> to vector<8x32xbf16>
    %cst_78 = arith.constant dense<0.000000e+00> : vector<8x128xf32>
    %224 = tpu.matmul %223, %218, %cst_78 {dimension_numbers = #tpu.dot_dimension_numbers<[1], [0], [0], [1], [0, 0, 1, 1], [], []>} : vector<8x32xbf16>, vector<32x128xbf16>, vector<8x128xf32> -> vector<8x128xf32>
    %225 = arith.addf %222, %224 : vector<8x128xf32>
    %226 = arith.negf %225 : vector<8x128xf32>
    %227 = math.exp %226 : vector<8x128xf32>
    %cst_79 = arith.constant 1.000000e+00 : f32
    %228 = vector.broadcast %cst_79 : f32 to vector<8x128xf32>
    %229 = arith.addf %228, %227 : vector<8x128xf32>
    %230 = arith.divf %228, %229 : vector<8x128xf32>
    %231 = math.tanh %225 : vector<8x128xf32>
    %232 = vector.extract_strided_slice %230 {offsets = [0, 0], sizes = [8, 32], strides = [1, 1]} : vector<8x128xf32> to vector<8x32xf32>
    %233 = vector.extract_strided_slice %230 {offsets = [0, 32], sizes = [8, 32], strides = [1, 1]} : vector<8x128xf32> to vector<8x32xf32>
    %234 = vector.extract_strided_slice %230 {offsets = [0, 96], sizes = [8, 32], strides = [1, 1]} : vector<8x128xf32> to vector<8x32xf32>
    %235 = vector.extract_strided_slice %231 {offsets = [0, 64], sizes = [8, 32], strides = [1, 1]} : vector<8x128xf32> to vector<8x32xf32>
    %236 = arith.mulf %233, %220 : vector<8x32xf32>
    %237 = arith.mulf %232, %235 : vector<8x32xf32>
    %238 = arith.addf %236, %237 : vector<8x32xf32>
    %239 = math.tanh %238 : vector<8x32xf32>
    %240 = arith.mulf %234, %239 : vector<8x32xf32>
    %c1_80 = arith.constant 1 : index
    %c0_81 = arith.constant 0 : index
    %c0_82 = arith.constant 0 : index
    %241 = vector.load %arg9[%c1_80, %c0_81, %c0_82] : memref<8x8x128xf32, #tpu.memory_space<vmem>>, vector<1x8x128xf32>
    %242 = vector.shape_cast %241 : vector<1x8x128xf32> to vector<8x128xf32>
    %243 = arith.truncf %240 : vector<8x32xf32> to vector<8x32xbf16>
    %cst_83 = arith.constant dense<0.000000e+00> : vector<8x128xf32>
    %244 = tpu.matmul %243, %218, %cst_83 {dimension_numbers = #tpu.dot_dimension_numbers<[1], [0], [0], [1], [0, 0, 1, 1], [], []>} : vector<8x32xbf16>, vector<32x128xbf16>, vector<8x128xf32> -> vector<8x128xf32>
    %245 = arith.addf %242, %244 : vector<8x128xf32>
    %246 = arith.negf %245 : vector<8x128xf32>
    %247 = math.exp %246 : vector<8x128xf32>
    %cst_84 = arith.constant 1.000000e+00 : f32
    %248 = vector.broadcast %cst_84 : f32 to vector<8x128xf32>
    %249 = arith.addf %248, %247 : vector<8x128xf32>
    %250 = arith.divf %248, %249 : vector<8x128xf32>
    %251 = math.tanh %245 : vector<8x128xf32>
    %252 = vector.extract_strided_slice %250 {offsets = [0, 0], sizes = [8, 32], strides = [1, 1]} : vector<8x128xf32> to vector<8x32xf32>
    %253 = vector.extract_strided_slice %250 {offsets = [0, 32], sizes = [8, 32], strides = [1, 1]} : vector<8x128xf32> to vector<8x32xf32>
    %254 = vector.extract_strided_slice %250 {offsets = [0, 96], sizes = [8, 32], strides = [1, 1]} : vector<8x128xf32> to vector<8x32xf32>
    %255 = vector.extract_strided_slice %251 {offsets = [0, 64], sizes = [8, 32], strides = [1, 1]} : vector<8x128xf32> to vector<8x32xf32>
    %256 = arith.mulf %253, %238 : vector<8x32xf32>
    %257 = arith.mulf %252, %255 : vector<8x32xf32>
    %258 = arith.addf %256, %257 : vector<8x32xf32>
    %259 = math.tanh %258 : vector<8x32xf32>
    %260 = arith.mulf %254, %259 : vector<8x32xf32>
    %c2_85 = arith.constant 2 : index
    %c0_86 = arith.constant 0 : index
    %c0_87 = arith.constant 0 : index
    %261 = vector.load %arg9[%c2_85, %c0_86, %c0_87] : memref<8x8x128xf32, #tpu.memory_space<vmem>>, vector<1x8x128xf32>
    %262 = vector.shape_cast %261 : vector<1x8x128xf32> to vector<8x128xf32>
    %263 = arith.truncf %260 : vector<8x32xf32> to vector<8x32xbf16>
    %cst_88 = arith.constant dense<0.000000e+00> : vector<8x128xf32>
    %264 = tpu.matmul %263, %218, %cst_88 {dimension_numbers = #tpu.dot_dimension_numbers<[1], [0], [0], [1], [0, 0, 1, 1], [], []>} : vector<8x32xbf16>, vector<32x128xbf16>, vector<8x128xf32> -> vector<8x128xf32>
    %265 = arith.addf %262, %264 : vector<8x128xf32>
    %266 = arith.negf %265 : vector<8x128xf32>
    %267 = math.exp %266 : vector<8x128xf32>
    %cst_89 = arith.constant 1.000000e+00 : f32
    %268 = vector.broadcast %cst_89 : f32 to vector<8x128xf32>
    %269 = arith.addf %268, %267 : vector<8x128xf32>
    %270 = arith.divf %268, %269 : vector<8x128xf32>
    %271 = math.tanh %265 : vector<8x128xf32>
    %272 = vector.extract_strided_slice %270 {offsets = [0, 0], sizes = [8, 32], strides = [1, 1]} : vector<8x128xf32> to vector<8x32xf32>
    %273 = vector.extract_strided_slice %270 {offsets = [0, 32], sizes = [8, 32], strides = [1, 1]} : vector<8x128xf32> to vector<8x32xf32>
    %274 = vector.extract_strided_slice %270 {offsets = [0, 96], sizes = [8, 32], strides = [1, 1]} : vector<8x128xf32> to vector<8x32xf32>
    %275 = vector.extract_strided_slice %271 {offsets = [0, 64], sizes = [8, 32], strides = [1, 1]} : vector<8x128xf32> to vector<8x32xf32>
    %276 = arith.mulf %273, %258 : vector<8x32xf32>
    %277 = arith.mulf %272, %275 : vector<8x32xf32>
    %278 = arith.addf %276, %277 : vector<8x32xf32>
    %279 = math.tanh %278 : vector<8x32xf32>
    %280 = arith.mulf %274, %279 : vector<8x32xf32>
    %c3_90 = arith.constant 3 : index
    %c0_91 = arith.constant 0 : index
    %c0_92 = arith.constant 0 : index
    %281 = vector.load %arg9[%c3_90, %c0_91, %c0_92] : memref<8x8x128xf32, #tpu.memory_space<vmem>>, vector<1x8x128xf32>
    %282 = vector.shape_cast %281 : vector<1x8x128xf32> to vector<8x128xf32>
    %283 = arith.truncf %280 : vector<8x32xf32> to vector<8x32xbf16>
    %cst_93 = arith.constant dense<0.000000e+00> : vector<8x128xf32>
    %284 = tpu.matmul %283, %218, %cst_93 {dimension_numbers = #tpu.dot_dimension_numbers<[1], [0], [0], [1], [0, 0, 1, 1], [], []>} : vector<8x32xbf16>, vector<32x128xbf16>, vector<8x128xf32> -> vector<8x128xf32>
    %285 = arith.addf %282, %284 : vector<8x128xf32>
    %286 = arith.negf %285 : vector<8x128xf32>
    %287 = math.exp %286 : vector<8x128xf32>
    %cst_94 = arith.constant 1.000000e+00 : f32
    %288 = vector.broadcast %cst_94 : f32 to vector<8x128xf32>
    %289 = arith.addf %288, %287 : vector<8x128xf32>
    %290 = arith.divf %288, %289 : vector<8x128xf32>
    %291 = math.tanh %285 : vector<8x128xf32>
    %292 = vector.extract_strided_slice %290 {offsets = [0, 0], sizes = [8, 32], strides = [1, 1]} : vector<8x128xf32> to vector<8x32xf32>
    %293 = vector.extract_strided_slice %290 {offsets = [0, 32], sizes = [8, 32], strides = [1, 1]} : vector<8x128xf32> to vector<8x32xf32>
    %294 = vector.extract_strided_slice %290 {offsets = [0, 96], sizes = [8, 32], strides = [1, 1]} : vector<8x128xf32> to vector<8x32xf32>
    %295 = vector.extract_strided_slice %291 {offsets = [0, 64], sizes = [8, 32], strides = [1, 1]} : vector<8x128xf32> to vector<8x32xf32>
    %296 = arith.mulf %293, %278 : vector<8x32xf32>
    %297 = arith.mulf %292, %295 : vector<8x32xf32>
    %298 = arith.addf %296, %297 : vector<8x32xf32>
    %299 = math.tanh %298 : vector<8x32xf32>
    %300 = arith.mulf %294, %299 : vector<8x32xf32>
    %c4_95 = arith.constant 4 : index
    %c0_96 = arith.constant 0 : index
    %c0_97 = arith.constant 0 : index
    %301 = vector.load %arg9[%c4_95, %c0_96, %c0_97] : memref<8x8x128xf32, #tpu.memory_space<vmem>>, vector<1x8x128xf32>
    %302 = vector.shape_cast %301 : vector<1x8x128xf32> to vector<8x128xf32>
    %303 = arith.truncf %300 : vector<8x32xf32> to vector<8x32xbf16>
    %cst_98 = arith.constant dense<0.000000e+00> : vector<8x128xf32>
    %304 = tpu.matmul %303, %218, %cst_98 {dimension_numbers = #tpu.dot_dimension_numbers<[1], [0], [0], [1], [0, 0, 1, 1], [], []>} : vector<8x32xbf16>, vector<32x128xbf16>, vector<8x128xf32> -> vector<8x128xf32>
    %305 = arith.addf %302, %304 : vector<8x128xf32>
    %306 = arith.negf %305 : vector<8x128xf32>
    %307 = math.exp %306 : vector<8x128xf32>
    %cst_99 = arith.constant 1.000000e+00 : f32
    %308 = vector.broadcast %cst_99 : f32 to vector<8x128xf32>
    %309 = arith.addf %308, %307 : vector<8x128xf32>
    %310 = arith.divf %308, %309 : vector<8x128xf32>
    %311 = math.tanh %305 : vector<8x128xf32>
    %312 = vector.extract_strided_slice %310 {offsets = [0, 0], sizes = [8, 32], strides = [1, 1]} : vector<8x128xf32> to vector<8x32xf32>
    %313 = vector.extract_strided_slice %310 {offsets = [0, 32], sizes = [8, 32], strides = [1, 1]} : vector<8x128xf32> to vector<8x32xf32>
    %314 = vector.extract_strided_slice %310 {offsets = [0, 96], sizes = [8, 32], strides = [1, 1]} : vector<8x128xf32> to vector<8x32xf32>
    %315 = vector.extract_strided_slice %311 {offsets = [0, 64], sizes = [8, 32], strides = [1, 1]} : vector<8x128xf32> to vector<8x32xf32>
    %316 = arith.mulf %313, %298 : vector<8x32xf32>
    %317 = arith.mulf %312, %315 : vector<8x32xf32>
    %318 = arith.addf %316, %317 : vector<8x32xf32>
    %319 = math.tanh %318 : vector<8x32xf32>
    %320 = arith.mulf %314, %319 : vector<8x32xf32>
    %c5_100 = arith.constant 5 : index
    %c0_101 = arith.constant 0 : index
    %c0_102 = arith.constant 0 : index
    %321 = vector.load %arg9[%c5_100, %c0_101, %c0_102] : memref<8x8x128xf32, #tpu.memory_space<vmem>>, vector<1x8x128xf32>
    %322 = vector.shape_cast %321 : vector<1x8x128xf32> to vector<8x128xf32>
    %323 = arith.truncf %320 : vector<8x32xf32> to vector<8x32xbf16>
    %cst_103 = arith.constant dense<0.000000e+00> : vector<8x128xf32>
    %324 = tpu.matmul %323, %218, %cst_103 {dimension_numbers = #tpu.dot_dimension_numbers<[1], [0], [0], [1], [0, 0, 1, 1], [], []>} : vector<8x32xbf16>, vector<32x128xbf16>, vector<8x128xf32> -> vector<8x128xf32>
    %325 = arith.addf %322, %324 : vector<8x128xf32>
    %326 = arith.negf %325 : vector<8x128xf32>
    %327 = math.exp %326 : vector<8x128xf32>
    %cst_104 = arith.constant 1.000000e+00 : f32
    %328 = vector.broadcast %cst_104 : f32 to vector<8x128xf32>
    %329 = arith.addf %328, %327 : vector<8x128xf32>
    %330 = arith.divf %328, %329 : vector<8x128xf32>
    %331 = math.tanh %325 : vector<8x128xf32>
    %332 = vector.extract_strided_slice %330 {offsets = [0, 0], sizes = [8, 32], strides = [1, 1]} : vector<8x128xf32> to vector<8x32xf32>
    %333 = vector.extract_strided_slice %330 {offsets = [0, 32], sizes = [8, 32], strides = [1, 1]} : vector<8x128xf32> to vector<8x32xf32>
    %334 = vector.extract_strided_slice %330 {offsets = [0, 96], sizes = [8, 32], strides = [1, 1]} : vector<8x128xf32> to vector<8x32xf32>
    %335 = vector.extract_strided_slice %331 {offsets = [0, 64], sizes = [8, 32], strides = [1, 1]} : vector<8x128xf32> to vector<8x32xf32>
    %336 = arith.mulf %333, %318 : vector<8x32xf32>
    %337 = arith.mulf %332, %335 : vector<8x32xf32>
    %338 = arith.addf %336, %337 : vector<8x32xf32>
    %339 = math.tanh %338 : vector<8x32xf32>
    %340 = arith.mulf %334, %339 : vector<8x32xf32>
    %c6_105 = arith.constant 6 : index
    %c0_106 = arith.constant 0 : index
    %c0_107 = arith.constant 0 : index
    %341 = vector.load %arg9[%c6_105, %c0_106, %c0_107] : memref<8x8x128xf32, #tpu.memory_space<vmem>>, vector<1x8x128xf32>
    %342 = vector.shape_cast %341 : vector<1x8x128xf32> to vector<8x128xf32>
    %343 = arith.truncf %340 : vector<8x32xf32> to vector<8x32xbf16>
    %cst_108 = arith.constant dense<0.000000e+00> : vector<8x128xf32>
    %344 = tpu.matmul %343, %218, %cst_108 {dimension_numbers = #tpu.dot_dimension_numbers<[1], [0], [0], [1], [0, 0, 1, 1], [], []>} : vector<8x32xbf16>, vector<32x128xbf16>, vector<8x128xf32> -> vector<8x128xf32>
    %345 = arith.addf %342, %344 : vector<8x128xf32>
    %346 = arith.negf %345 : vector<8x128xf32>
    %347 = math.exp %346 : vector<8x128xf32>
    %cst_109 = arith.constant 1.000000e+00 : f32
    %348 = vector.broadcast %cst_109 : f32 to vector<8x128xf32>
    %349 = arith.addf %348, %347 : vector<8x128xf32>
    %350 = arith.divf %348, %349 : vector<8x128xf32>
    %351 = math.tanh %345 : vector<8x128xf32>
    %352 = vector.extract_strided_slice %350 {offsets = [0, 0], sizes = [8, 32], strides = [1, 1]} : vector<8x128xf32> to vector<8x32xf32>
    %353 = vector.extract_strided_slice %350 {offsets = [0, 32], sizes = [8, 32], strides = [1, 1]} : vector<8x128xf32> to vector<8x32xf32>
    %354 = vector.extract_strided_slice %350 {offsets = [0, 96], sizes = [8, 32], strides = [1, 1]} : vector<8x128xf32> to vector<8x32xf32>
    %355 = vector.extract_strided_slice %351 {offsets = [0, 64], sizes = [8, 32], strides = [1, 1]} : vector<8x128xf32> to vector<8x32xf32>
    %356 = arith.mulf %353, %338 : vector<8x32xf32>
    %357 = arith.mulf %352, %355 : vector<8x32xf32>
    %358 = arith.addf %356, %357 : vector<8x32xf32>
    %359 = math.tanh %358 : vector<8x32xf32>
    %360 = arith.mulf %354, %359 : vector<8x32xf32>
    %c7_110 = arith.constant 7 : index
    %c0_111 = arith.constant 0 : index
    %c0_112 = arith.constant 0 : index
    %361 = vector.load %arg9[%c7_110, %c0_111, %c0_112] : memref<8x8x128xf32, #tpu.memory_space<vmem>>, vector<1x8x128xf32>
    %362 = vector.shape_cast %361 : vector<1x8x128xf32> to vector<8x128xf32>
    %363 = arith.truncf %360 : vector<8x32xf32> to vector<8x32xbf16>
    %cst_113 = arith.constant dense<0.000000e+00> : vector<8x128xf32>
    %364 = tpu.matmul %363, %218, %cst_113 {dimension_numbers = #tpu.dot_dimension_numbers<[1], [0], [0], [1], [0, 0, 1, 1], [], []>} : vector<8x32xbf16>, vector<32x128xbf16>, vector<8x128xf32> -> vector<8x128xf32>
    %365 = arith.addf %362, %364 : vector<8x128xf32>
    %366 = arith.negf %365 : vector<8x128xf32>
    %367 = math.exp %366 : vector<8x128xf32>
    %cst_114 = arith.constant 1.000000e+00 : f32
    %368 = vector.broadcast %cst_114 : f32 to vector<8x128xf32>
    %369 = arith.addf %368, %367 : vector<8x128xf32>
    %370 = arith.divf %368, %369 : vector<8x128xf32>
    %371 = math.tanh %365 : vector<8x128xf32>
    %372 = vector.extract_strided_slice %370 {offsets = [0, 0], sizes = [8, 32], strides = [1, 1]} : vector<8x128xf32> to vector<8x32xf32>
    %373 = vector.extract_strided_slice %370 {offsets = [0, 32], sizes = [8, 32], strides = [1, 1]} : vector<8x128xf32> to vector<8x32xf32>
    %374 = vector.extract_strided_slice %370 {offsets = [0, 96], sizes = [8, 32], strides = [1, 1]} : vector<8x128xf32> to vector<8x32xf32>
    %375 = vector.extract_strided_slice %371 {offsets = [0, 64], sizes = [8, 32], strides = [1, 1]} : vector<8x128xf32> to vector<8x32xf32>
    %376 = arith.mulf %373, %358 : vector<8x32xf32>
    %377 = arith.mulf %372, %375 : vector<8x32xf32>
    %378 = arith.addf %376, %377 : vector<8x32xf32>
    %379 = math.tanh %378 : vector<8x32xf32>
    %380 = arith.mulf %374, %379 : vector<8x32xf32>
    %381 = tpu.concatenate %210, %208, %380, %378 in 1 : vector<8x32xf32>, vector<8x32xf32>, vector<8x32xf32>, vector<8x32xf32> -> vector<8x128xf32>
    %382 = math.tanh %381 : vector<8x128xf32>
    %383 = arith.truncf %382 : vector<8x128xf32> to vector<8x128xbf16>
    %c0_115 = arith.constant 0 : index
    %c0_116 = arith.constant 0 : index
    %384 = vector.load %arg6[%c0_115, %c0_116] : memref<128x32xf32, #tpu.memory_space<vmem>>, vector<128x32xf32>
    %385 = arith.truncf %384 : vector<128x32xf32> to vector<128x32xbf16>
    %cst_117 = arith.constant dense<0.000000e+00> : vector<8x32xf32>
    %386 = tpu.matmul %383, %385, %cst_117 {dimension_numbers = #tpu.dot_dimension_numbers<[1], [0], [0], [1], [0, 0, 1, 1], [], []>} : vector<8x128xbf16>, vector<128x32xbf16>, vector<8x32xf32> -> vector<8x32xf32>
    %c0_118 = arith.constant 0 : index
    %c0_119 = arith.constant 0 : index
    %387 = vector.load %arg7[%c0_118, %c0_119] : memref<1x32xf32, #tpu.memory_space<vmem>>, vector<1x32xf32>
    %388 = vector.broadcast %387 : vector<1x32xf32> to vector<8x32xf32>
    %389 = arith.addf %386, %388 : vector<8x32xf32>
    %c0_120 = arith.constant 0 : index
    %c0_121 = arith.constant 0 : index
    %390 = vector.load %arg8[%c0_120, %c0_121] : memref<8x32xf32, #tpu.memory_space<vmem>>, vector<8x32xf32>
    tpu.vector_store %arg8[%c0_120, %c0_121], %389 {strides = array<i32>} : memref<8x32xf32, #tpu.memory_space<vmem>>, vector<8x32xf32>,
    return
  }
  func.func @transform_0(%arg0: i32) -> (i32, i32, i32) {
    %c0_i32 = arith.constant 0 : i32
    %c0_i32_0 = arith.constant 0 : i32
    %c0_i32_1 = arith.constant 0 : i32
    return %c0_i32, %arg0, %c0_i32_0 : i32, i32, i32
  }
  func.func @transform_1(%arg0: i32) -> (i32, i32) {
    %c0_i32 = arith.constant 0 : i32
    %c0_i32_0 = arith.constant 0 : i32
    %c0_i32_1 = arith.constant 0 : i32
    return %c0_i32, %c0_i32_0 : i32, i32
  }
  func.func @transform_2(%arg0: i32) -> (i32, i32) {
    %c0_i32 = arith.constant 0 : i32
    %c0_i32_0 = arith.constant 0 : i32
    %c0_i32_1 = arith.constant 0 : i32
    return %c0_i32, %c0_i32_0 : i32, i32
  }
  func.func @transform_3(%arg0: i32) -> (i32, i32) {
    %c0_i32 = arith.constant 0 : i32
    %c0_i32_0 = arith.constant 0 : i32
    %c0_i32_1 = arith.constant 0 : i32
    return %c0_i32, %c0_i32_0 : i32, i32
  }
  func.func @transform_4(%arg0: i32) -> (i32, i32) {
    %c0_i32 = arith.constant 0 : i32
    %c0_i32_0 = arith.constant 0 : i32
    %c0_i32_1 = arith.constant 0 : i32
    return %c0_i32, %c0_i32_0 : i32, i32
  }
  func.func @transform_5(%arg0: i32) -> (i32, i32) {
    %c0_i32 = arith.constant 0 : i32
    %c0_i32_0 = arith.constant 0 : i32
    %c0_i32_1 = arith.constant 0 : i32
    return %c0_i32, %c0_i32_0 : i32, i32
  }
  func.func @transform_6(%arg0: i32) -> (i32, i32) {
    %c0_i32 = arith.constant 0 : i32
    %c0_i32_0 = arith.constant 0 : i32
    %c0_i32_1 = arith.constant 0 : i32
    return %c0_i32, %c0_i32_0 : i32, i32
  }
  func.func @transform_7(%arg0: i32) -> (i32, i32) {
    %c0_i32 = arith.constant 0 : i32
    %c0_i32_0 = arith.constant 0 : i32
    return %arg0, %c0_i32 : i32, i32
  }
}

</mosaic_0001>

<llo_original>
// kernel: tpu_custom_call.1
$region0: #{tpu_custom_call.1}
  #allocation0 [shape = 'u32[]', space=smem, size = 0x4, offset = 0x4, fixed_abs, tag = 'smem constant byte address 0x4 - core index']
  #allocation1 [shape = 'u32[72,128]{1,0:T(1,128)}', space=vmem, size = 0x9000, scoped, tag = 'internal scratch']
  #allocation2 [shape = 'f32[8,8,128]{2,1,0:T(8,128)}', space=vmem, size = 0x8000, scoped, tag = 'scratch operand']
  %s0 = inlined_call_operand.vmem [shape: f32[8,8,128], index: 0, kind: input, shape index: {}]
  %s1 = inlined_call_operand.vmem [shape: f32[32,128], index: 1, kind: input, shape index: {}]
  %s2 = inlined_call_operand.vmem [shape: f32[32,128], index: 2, kind: input, shape index: {}]
  %s3 = inlined_call_operand.vmem [shape: f32[32,128], index: 3, kind: input, shape index: {}]
  %s4 = inlined_call_operand.vmem [shape: f32[1,128], index: 4, kind: input, shape index: {}]
  %s5 = inlined_call_operand.vmem [shape: f32[128,32], index: 5, kind: input, shape index: {}]
  %s6 = inlined_call_operand.vmem [shape: f32[1,32], index: 6, kind: input, shape index: {}]
  %s7 = inlined_call_operand.hbm [shape: f32[8,32], index: 7, kind: output, shape index: {}]
  %s8 = sld [smem:[#allocation0]]
  $region38: #{tpu_custom_call.1} parent=0
    _
  %s10 = ssub.s32 1, %s8
  %s11 = scalar_select 0, %s10, %s8
  $region1: #{tpu_custom_call.1} parent=0
    #allocation3 [shape = 'u8[4096]{0}', space=vmem, size = 0x1000, scoped, tag = 'output window, operand 0, single buffered']
    #allocation4 [shape = 's32[1]{0}', space=sflag, size = 0x4, scoped, tag = 'scoped memory for tpu_custom_call.1']
    %12 = vsyncpa [#allocation4], 0
    // Predicated region
    $region2: #{tpu_custom_call.1} parent=1 // pred_check
      _
    $region3: #{tpu_custom_call.1} parent=1 // pred_check_branch
      %14 = sbr.rel (0) target = $region5
    $region4: #{tpu_custom_call.1} parent=1 // pred_region
      _
    $region5: #{tpu_custom_call.1} parent=1 // pred_fallthru
      _
    // Predicated region
    $region6: #{tpu_custom_call.1} parent=1 // pred_check
      _
    $region7: #{tpu_custom_call.1} parent=1 // pred_check_branch
      %16 = sbr.rel (0) target = $region9
    $region8: #{tpu_custom_call.1} parent=1 // pred_region
      _
    $region9: #{tpu_custom_call.1} parent=1 // pred_fallthru
      _
    // Predicated region
    $region10: #{tpu_custom_call.1} parent=1 // pred_check
      _
    $region11: #{tpu_custom_call.1} parent=1 // pred_check_branch
      %18 = sbr.rel (0) target = $region13
    $region12: #{tpu_custom_call.1} parent=1 // pred_region
      _
    $region13: #{tpu_custom_call.1} parent=1 // pred_fallthru
      _
    // Predicated region
    $region14: #{tpu_custom_call.1} parent=1 // pred_check
      _
    $region15: #{tpu_custom_call.1} parent=1 // pred_check_branch
      %20 = sbr.rel (0) target = $region17
    $region16: #{tpu_custom_call.1} parent=1 // pred_region
      _
    $region17: #{tpu_custom_call.1} parent=1 // pred_fallthru
      _
    // Predicated region
    $region18: #{tpu_custom_call.1} parent=1 // pred_check
      _
    $region19: #{tpu_custom_call.1} parent=1 // pred_check_branch
      %22 = sbr.rel (0) target = $region21
    $region20: #{tpu_custom_call.1} parent=1 // pred_region
      _
    $region21: #{tpu_custom_call.1} parent=1 // pred_fallthru
      _
    // Predicated region
    $region22: #{tpu_custom_call.1} parent=1 // pred_check
      _
    $region23: #{tpu_custom_call.1} parent=1 // pred_check_branch
      %24 = sbr.rel (0) target = $region25
    $region24: #{tpu_custom_call.1} parent=1 // pred_region
      _
    $region25: #{tpu_custom_call.1} parent=1 // pred_fallthru
      _
    // Predicated region
    $region26: #{tpu_custom_call.1} parent=1 // pred_check
      _
    $region27: #{tpu_custom_call.1} parent=1 // pred_check_branch
      %26 = sbr.rel (0) target = $region29
    $region28: #{tpu_custom_call.1} parent=1 // pred_region
      _
    $region29: #{tpu_custom_call.1} parent=1 // pred_fallthru
      _
    %v28 = vld [vmem:[%s1] sm:$0xff]
    %v29 = vld [vmem:[%s1 + $0x8] sm:$0xff]
    %v30 = vld [vmem:[%s1 + $0x10] sm:$0xff]
    %v31 = vld [vmem:[%s1 + $0x18] sm:$0xff]
    %v32 = vpack.c.bf16 %v29, %v28
    %v33 = vpack.c.bf16 %v31, %v30
    %v34 = vld [vmem:[%s3] sm:$0xff]
    %v35 = vld [vmem:[%s3 + $0x8] sm:$0xff]
    %v36 = vld [vmem:[%s3 + $0x10] sm:$0xff]
    %v37 = vld [vmem:[%s3 + $0x18] sm:$0xff]
    %v38 = vpack.c.bf16 %v35, %v34
    %v39 = vpack.c.bf16 %v37, %v36
    %v40 = vld [vmem:[%s4] sm:$0x1]
    %v42 = vperm.slane %v40, 0
    %v44 = vld [vmem:[%s0] sm:$0xff]
    %vm45 = vcmask 261120
    %v47 = vsel %vm45, 0, 0
    %49 = vmatpush.bf16.msra.mxu0 0
    %50 = vmatpush.bf16.msra.mxu0 0
    %51 = vmatpush.bf16.msra.mxu0 0
    %52 = vmatpush.bf16.msra.mxu0 0
    %53 = vmatpush.bf16.msra.mxu0 0
    %54 = vmatpush.bf16.msra.mxu0 0
    %55 = vmatpush.bf16.msra.mxu0 %v33
    %56 = vmatpush.bf16.msra.mxu0 %v32
    %57 = vmatmul.bf16.gmra.mxu0 %v47
    %v58 = vpop.f32.mrf.mxu0
    %v59 = vadd.f32 0.0, %v58
    %v60 = vpop.f32.mrf.mxu0
    %61 = vdwg.mxu0
    %v62 = vadd.f32 %v44, %v59
    %v63 = vxor.u32 %v62, 2147483648
    %v64 = vmul.f32 %v63, 1.442695
    %v65 = vpow.pop %v64
    %v66 = vadd.f32 %v65, 1.0
    %v67 = vrcp.pop %v66
    %v68 = vmul.f32 %v66, %v67
    %v69 = vsub.f32 1.0, %v68
    %v70 = vmul.f32 %v67, %v69
    %v71 = vadd.f32 %v67, %v70
    %vm72 = vweird.f32 %v66
    %vm73 = vweird.f32 %v67
    %vm74 = vmor %vm72, %vm73
    %v75 = vsel %vm74, %v67, %v71
    %v76 = vand.u32 2147483647, %v66
    %vm77 = vcmp.eq.f32.partialorder %v76, 8.507059e+37
    %v78 = vand.u32 %v66, 2147483648
    %v79 = vor.u32 1.1754944e-38, %v78
    %v80 = vsel %vm77, %v79, %v75
    %v81 = vmul.f32 1.0, %v80
    %v82 = vtanh.pop %v62
    %v83 = vmul.f32 %v81, 0.0
    %85 = vrot.lane.b32.xlu0 %v82, 64
    %v86 = vpop.permute.xlu0 %85
    %v88 = vmul.f32 %v81, %v86
    %90 = vrot.lane.b32.xlu0 %v88, 32
    %v91 = vpop.permute.xlu0 %90
    %v93 = vadd.f32 %v83, %v91
    %v94 = vtanh.pop %v93
    %96 = vrot.lane.b32.xlu0 %v94, 64
    %v97 = vpop.permute.xlu0 %96
    %v99 = vmul.f32 %v81, %v97
    %v100 = vpack.c.bf16 %v99, %v99
    %102 = vrot.lane.b32.xlu0 %v100, 32
    %v103 = vpop.permute.xlu0 %102
    %v105 = vsel %vm45, %v103, 0
    %107 = vmatpush.bf16.msra.mxu0 0
    %108 = vmatpush.bf16.msra.mxu0 0
    %109 = vmatpush.bf16.msra.mxu0 0
    %110 = vmatpush.bf16.msra.mxu0 0
    %111 = vmatpush.bf16.msra.mxu0 0
    %112 = vmatpush.bf16.msra.mxu0 0
    %113 = vmatpush.bf16.msra.mxu0 %v39
    %114 = vmatpush.bf16.msra.mxu0 %v38
    %115 = vmatmul.bf16.gmra.mxu0 %v105
    %v116 = vpop.f32.mrf.mxu0
    %v117 = vadd.f32 %v42, %v116
    %v118 = vpop.f32.mrf.mxu0
    %119 = vdwg.mxu0
    %120 = vst [vmem:[#allocation2] sm:$0xff] %v117
    %s121 = scalar_lea.vmem %s0, 8
    %v122 = vld [vmem:[%s121] sm:$0xff]
    %123 = vmatpush.bf16.msra.mxu0 0
    %124 = vmatpush.bf16.msra.mxu0 0
    %125 = vmatpush.bf16.msra.mxu0 0
    %126 = vmatpush.bf16.msra.mxu0 0
    %127 = vmatpush.bf16.msra.mxu0 0
    %128 = vmatpush.bf16.msra.mxu0 0
    %129 = vmatpush.bf16.msra.mxu0 %v33
    %130 = vmatpush.bf16.msra.mxu0 %v32
    %131 = vmatmul.bf16.gmra.mxu0 %v105
    %v132 = vpop.f32.mrf.mxu0
    %v133 = vadd.f32 0.0, %v132
    %v134 = vpop.f32.mrf.mxu0
    %135 = vdwg.mxu0
    %v136 = vadd.f32 %v122, %v133
    %v137 = vxor.u32 %v136, 2147483648
    %v138 = vmul.f32 %v137, 1.442695
    %v139 = vpow.pop %v138
    %v140 = vadd.f32 %v139, 1.0
    %v141 = vrcp.pop %v140
    %v142 = vmul.f32 %v140, %v141
    %v143 = vsub.f32 1.0, %v142
    %v144 = vmul.f32 %v141, %v143
    %v145 = vadd.f32 %v141, %v144
    %vm146 = vweird.f32 %v140
    %vm147 = vweird.f32 %v141
    %vm148 = vmor %vm146, %vm147
    %v149 = vsel %vm148, %v141, %v145
    %v150 = vand.u32 2147483647, %v140
    %vm151 = vcmp.eq.f32.partialorder %v150, 8.507059e+37
    %v152 = vand.u32 %v140, 2147483648
    %v153 = vor.u32 1.1754944e-38, %v152
    %v154 = vsel %vm151, %v153, %v149
    %v155 = vmul.f32 1.0, %v154
    %v156 = vtanh.pop %v136
    %v157 = vmul.f32 %v155, %v93
    %159 = vrot.lane.b32.xlu0 %v156, 64
    %v160 = vpop.permute.xlu0 %159
    %v162 = vmul.f32 %v155, %v160
    %164 = vrot.lane.b32.xlu0 %v162, 32
    %v165 = vpop.permute.xlu0 %164
    %v167 = vadd.f32 %v157, %v165
    %v168 = vtanh.pop %v167
    %170 = vrot.lane.b32.xlu0 %v168, 64
    %v171 = vpop.permute.xlu0 %170
    %v173 = vmul.f32 %v155, %v171
    %v174 = vpack.c.bf16 %v173, %v173
    %176 = vrot.lane.b32.xlu0 %v174, 32
    %v177 = vpop.permute.xlu0 %176
    %v179 = vsel %vm45, %v177, 0
    %181 = vmatpush.bf16.msra.mxu0 0
    %182 = vmatpush.bf16.msra.mxu0 0
    %183 = vmatpush.bf16.msra.mxu0 0
    %184 = vmatpush.bf16.msra.mxu0 0
    %185 = vmatpush.bf16.msra.mxu0 0
    %186 = vmatpush.bf16.msra.mxu0 0
    %187 = vmatpush.bf16.msra.mxu0 %v39
    %188 = vmatpush.bf16.msra.mxu0 %v38
    %189 = vmatmul.bf16.gmra.mxu0 %v179
    %v190 = vpop.f32.mrf.mxu0
    %v191 = vadd.f32 %v42, %v190
    %v192 = vpop.f32.mrf.mxu0
    %193 = vdwg.mxu0
    %s194 = scalar_lea.vmem [#allocation2], 8
    %195 = vst [vmem:[%s194] sm:$0xff] %v191
    %s196 = scalar_lea.vmem %s0, 16
    %v197 = vld [vmem:[%s196] sm:$0xff]
    %198 = vmatpush.bf16.msra.mxu0 0
    %199 = vmatpush.bf16.msra.mxu0 0
    %200 = vmatpush.bf16.msra.mxu0 0
    %201 = vmatpush.bf16.msra.mxu0 0
    %202 = vmatpush.bf16.msra.mxu0 0
    %203 = vmatpush.bf16.msra.mxu0 0
    %204 = vmatpush.bf16.msra.mxu0 %v33
    %205 = vmatpush.bf16.msra.mxu0 %v32
    %206 = vmatmul.bf16.gmra.mxu0 %v179
    %v207 = vpop.f32.mrf.mxu0
    %v208 = vadd.f32 0.0, %v207
    %v209 = vpop.f32.mrf.mxu0
    %210 = vdwg.mxu0
    %v211 = vadd.f32 %v197, %v208
    %v212 = vxor.u32 %v211, 2147483648
    %v213 = vmul.f32 %v212, 1.442695
    %v214 = vpow.pop %v213
    %v215 = vadd.f32 %v214, 1.0
    %v216 = vrcp.pop %v215
    %v217 = vmul.f32 %v215, %v216
    %v218 = vsub.f32 1.0, %v217
    %v219 = vmul.f32 %v216, %v218
    %v220 = vadd.f32 %v216, %v219
    %vm221 = vweird.f32 %v215
    %vm222 = vweird.f32 %v216
    %vm223 = vmor %vm221, %vm222
    %v224 = vsel %vm223, %v216, %v220
    %v225 = vand.u32 2147483647, %v215
    %vm226 = vcmp.eq.f32.partialorder %v225, 8.507059e+37
    %v227 = vand.u32 %v215, 2147483648
    %v228 = vor.u32 1.1754944e-38, %v227
    %v229 = vsel %vm226, %v228, %v224
    %v230 = vmul.f32 1.0, %v229
    %v231 = vtanh.pop %v211
    %v232 = vmul.f32 %v230, %v167
    %234 = vrot.lane.b32.xlu0 %v231, 64
    %v235 = vpop.permute.xlu0 %234
    %v237 = vmul.f32 %v230, %v235
    %239 = vrot.lane.b32.xlu0 %v237, 32
    %v240 = vpop.permute.xlu0 %239
    %v242 = vadd.f32 %v232, %v240
    %v243 = vtanh.pop %v242
    %245 = vrot.lane.b32.xlu0 %v243, 64
    %v246 = vpop.permute.xlu0 %245
    %v248 = vmul.f32 %v230, %v246
    %v249 = vpack.c.bf16 %v248, %v248
    %251 = vrot.lane.b32.xlu0 %v249, 32
    %v252 = vpop.permute.xlu0 %251
    %v254 = vsel %vm45, %v252, 0
    %256 = vmatpush.bf16.msra.mxu0 0
    %257 = vmatpush.bf16.msra.mxu0 0
    %258 = vmatpush.bf16.msra.mxu0 0
    %259 = vmatpush.bf16.msra.mxu0 0
    %260 = vmatpush.bf16.msra.mxu0 0
    %261 = vmatpush.bf16.msra.mxu0 0
    %262 = vmatpush.bf16.msra.mxu0 %v39
    %263 = vmatpush.bf16.msra.mxu0 %v38
    %264 = vmatmul.bf16.gmra.mxu0 %v254
    %v265 = vpop.f32.mrf.mxu0
    %v266 = vadd.f32 %v42, %v265
    %v267 = vpop.f32.mrf.mxu0
    %268 = vdwg.mxu0
    %s269 = scalar_lea.vmem [#allocation2], 16
    %270 = vst [vmem:[%s269] sm:$0xff] %v266
    %s271 = scalar_lea.vmem %s0, 24
    %v272 = vld [vmem:[%s271] sm:$0xff]
    %273 = vmatpush.bf16.msra.mxu0 0
    %274 = vmatpush.bf16.msra.mxu0 0
    %275 = vmatpush.bf16.msra.mxu0 0
    %276 = vmatpush.bf16.msra.mxu0 0
    %277 = vmatpush.bf16.msra.mxu0 0
    %278 = vmatpush.bf16.msra.mxu0 0
    %279 = vmatpush.bf16.msra.mxu0 %v33
    %280 = vmatpush.bf16.msra.mxu0 %v32
    %281 = vmatmul.bf16.gmra.mxu0 %v254
    %v282 = vpop.f32.mrf.mxu0
    %v283 = vadd.f32 0.0, %v282
    %v284 = vpop.f32.mrf.mxu0
    %285 = vdwg.mxu0
    %v286 = vadd.f32 %v272, %v283
    %v287 = vxor.u32 %v286, 2147483648
    %v288 = vmul.f32 %v287, 1.442695
    %v289 = vpow.pop %v288
    %v290 = vadd.f32 %v289, 1.0
    %v291 = vrcp.pop %v290
    %v292 = vmul.f32 %v290, %v291
    %v293 = vsub.f32 1.0, %v292
    %v294 = vmul.f32 %v291, %v293
    %v295 = vadd.f32 %v291, %v294
    %vm296 = vweird.f32 %v290
    %vm297 = vweird.f32 %v291
    %vm298 = vmor %vm296, %vm297
    %v299 = vsel %vm298, %v291, %v295
    %v300 = vand.u32 2147483647, %v290
    %vm301 = vcmp.eq.f32.partialorder %v300, 8.507059e+37
    %v302 = vand.u32 %v290, 2147483648
    %v303 = vor.u32 1.1754944e-38, %v302
    %v304 = vsel %vm301, %v303, %v299
    %v305 = vmul.f32 1.0, %v304
    %v306 = vtanh.pop %v286
    %v307 = vmul.f32 %v305, %v242
    %309 = vrot.lane.b32.xlu0 %v306, 64
    %v310 = vpop.permute.xlu0 %309
    %v312 = vmul.f32 %v305, %v310
    %314 = vrot.lane.b32.xlu0 %v312, 32
    %v315 = vpop.permute.xlu0 %314
    %v317 = vadd.f32 %v307, %v315
    %v318 = vtanh.pop %v317
    %320 = vrot.lane.b32.xlu0 %v318, 64
    %v321 = vpop.permute.xlu0 %320
    %v323 = vmul.f32 %v305, %v321
    %v324 = vpack.c.bf16 %v323, %v323
    %326 = vrot.lane.b32.xlu0 %v324, 32
    %v327 = vpop.permute.xlu0 %326
    %v329 = vsel %vm45, %v327, 0
    %331 = vmatpush.bf16.msra.mxu0 0
    %332 = vmatpush.bf16.msra.mxu0 0
    %333 = vmatpush.bf16.msra.mxu0 0
    %334 = vmatpush.bf16.msra.mxu0 0
    %335 = vmatpush.bf16.msra.mxu0 0
    %336 = vmatpush.bf16.msra.mxu0 0
    %337 = vmatpush.bf16.msra.mxu0 %v39
    %338 = vmatpush.bf16.msra.mxu0 %v38
    %339 = vmatmul.bf16.gmra.mxu0 %v329
    %v340 = vpop.f32.mrf.mxu0
    %v341 = vadd.f32 %v42, %v340
    %v342 = vpop.f32.mrf.mxu0
    %343 = vdwg.mxu0
    %s344 = scalar_lea.vmem [#allocation2], 24
    %345 = vst [vmem:[%s344] sm:$0xff] %v341
    %s346 = scalar_lea.vmem %s0, 32
    %v347 = vld [vmem:[%s346] sm:$0xff]
    %348 = vmatpush.bf16.msra.mxu0 0
    %349 = vmatpush.bf16.msra.mxu0 0
    %350 = vmatpush.bf16.msra.mxu0 0
    %351 = vmatpush.bf16.msra.mxu0 0
    %352 = vmatpush.bf16.msra.mxu0 0
    %353 = vmatpush.bf16.msra.mxu0 0
    %354 = vmatpush.bf16.msra.mxu0 %v33
    %355 = vmatpush.bf16.msra.mxu0 %v32
    %356 = vmatmul.bf16.gmra.mxu0 %v329
    %v357 = vpop.f32.mrf.mxu0
    %v358 = vadd.f32 0.0, %v357
    %v359 = vpop.f32.mrf.mxu0
    %360 = vdwg.mxu0
    %v361 = vadd.f32 %v347, %v358
    %v362 = vxor.u32 %v361, 2147483648
    %v363 = vmul.f32 %v362, 1.442695
    %v364 = vpow.pop %v363
    %v365 = vadd.f32 %v364, 1.0
    %v366 = vrcp.pop %v365
    %v367 = vmul.f32 %v365, %v366
    %v368 = vsub.f32 1.0, %v367
    %v369 = vmul.f32 %v366, %v368
    %v370 = vadd.f32 %v366, %v369
    %vm371 = vweird.f32 %v365
    %vm372 = vweird.f32 %v366
    %vm373 = vmor %vm371, %vm372
    %v374 = vsel %vm373, %v366, %v370
    %v375 = vand.u32 2147483647, %v365
    %vm376 = vcmp.eq.f32.partialorder %v375, 8.507059e+37
    %v377 = vand.u32 %v365, 2147483648
    %v378 = vor.u32 1.1754944e-38, %v377
    %v379 = vsel %vm376, %v378, %v374
    %v380 = vmul.f32 1.0, %v379
    %v381 = vtanh.pop %v361
    %v382 = vmul.f32 %v380, %v317
    %384 = vrot.lane.b32.xlu0 %v381, 64
    %v385 = vpop.permute.xlu0 %384
    %v387 = vmul.f32 %v380, %v385
    %389 = vrot.lane.b32.xlu0 %v387, 32
    %v390 = vpop.permute.xlu0 %389
    %v392 = vadd.f32 %v382, %v390
    %v393 = vtanh.pop %v392
    %395 = vrot.lane.b32.xlu0 %v393, 64
    %v396 = vpop.permute.xlu0 %395
    %v398 = vmul.f32 %v380, %v396
    %v399 = vpack.c.bf16 %v398, %v398
    %401 = vrot.lane.b32.xlu0 %v399, 32
    %v402 = vpop.permute.xlu0 %401
    %v404 = vsel %vm45, %v402, 0
    %406 = vmatpush.bf16.msra.mxu0 0
    %407 = vmatpush.bf16.msra.mxu0 0
    %408 = vmatpush.bf16.msra.mxu0 0
    %409 = vmatpush.bf16.msra.mxu0 0
    %410 = vmatpush.bf16.msra.mxu0 0
    %411 = vmatpush.bf16.msra.mxu0 0
    %412 = vmatpush.bf16.msra.mxu0 %v39
    %413 = vmatpush.bf16.msra.mxu0 %v38
    %414 = vmatmul.bf16.gmra.mxu0 %v404
    %v415 = vpop.f32.mrf.mxu0
    %v416 = vadd.f32 %v42, %v415
    %v417 = vpop.f32.mrf.mxu0
    %418 = vdwg.mxu0
    %s419 = scalar_lea.vmem [#allocation2], 32
    %420 = vst [vmem:[%s419] sm:$0xff] %v416
    %s421 = scalar_lea.vmem %s0, 40
    %v422 = vld [vmem:[%s421] sm:$0xff]
    %423 = vmatpush.bf16.msra.mxu0 0
    %424 = vmatpush.bf16.msra.mxu0 0
    %425 = vmatpush.bf16.msra.mxu0 0
    %426 = vmatpush.bf16.msra.mxu0 0
    %427 = vmatpush.bf16.msra.mxu0 0
    %428 = vmatpush.bf16.msra.mxu0 0
    %429 = vmatpush.bf16.msra.mxu0 %v33
    %430 = vmatpush.bf16.msra.mxu0 %v32
    %431 = vmatmul.bf16.gmra.mxu0 %v404
    %v432 = vpop.f32.mrf.mxu0
    %v433 = vadd.f32 0.0, %v432
    %v434 = vpop.f32.mrf.mxu0
    %435 = vdwg.mxu0
    %v436 = vadd.f32 %v422, %v433
    %v437 = vxor.u32 %v436, 2147483648
    %v438 = vmul.f32 %v437, 1.442695
    %v439 = vpow.pop %v438
    %v440 = vadd.f32 %v439, 1.0
    %v441 = vrcp.pop %v440
    %v442 = vmul.f32 %v440, %v441
    %v443 = vsub.f32 1.0, %v442
    %v444 = vmul.f32 %v441, %v443
    %v445 = vadd.f32 %v441, %v444
    %vm446 = vweird.f32 %v440
    %vm447 = vweird.f32 %v441
    %vm448 = vmor %vm446, %vm447
    %v449 = vsel %vm448, %v441, %v445
    %v450 = vand.u32 2147483647, %v440
    %vm451 = vcmp.eq.f32.partialorder %v450, 8.507059e+37
    %v452 = vand.u32 %v440, 2147483648
    %v453 = vor.u32 1.1754944e-38, %v452
    %v454 = vsel %vm451, %v453, %v449
    %v455 = vmul.f32 1.0, %v454
    %v456 = vtanh.pop %v436
    %v457 = vmul.f32 %v455, %v392
    %459 = vrot.lane.b32.xlu0 %v456, 64
    %v460 = vpop.permute.xlu0 %459
    %v462 = vmul.f32 %v455, %v460
    %464 = vrot.lane.b32.xlu0 %v462, 32
    %v465 = vpop.permute.xlu0 %464
    %v467 = vadd.f32 %v457, %v465
    %v468 = vtanh.pop %v467
    %470 = vrot.lane.b32.xlu0 %v468, 64
    %v471 = vpop.permute.xlu0 %470
    %v473 = vmul.f32 %v455, %v471
    %v474 = vpack.c.bf16 %v473, %v473
    %476 = vrot.lane.b32.xlu0 %v474, 32
    %v477 = vpop.permute.xlu0 %476
    %v479 = vsel %vm45, %v477, 0
    %481 = vmatpush.bf16.msra.mxu0 0
    %482 = vmatpush.bf16.msra.mxu0 0
    %483 = vmatpush.bf16.msra.mxu0 0
    %484 = vmatpush.bf16.msra.mxu0 0
    %485 = vmatpush.bf16.msra.mxu0 0
    %486 = vmatpush.bf16.msra.mxu0 0
    %487 = vmatpush.bf16.msra.mxu0 %v39
    %488 = vmatpush.bf16.msra.mxu0 %v38
    %489 = vmatmul.bf16.gmra.mxu0 %v479
    %v490 = vpop.f32.mrf.mxu0
    %v491 = vadd.f32 %v42, %v490
    %v492 = vpop.f32.mrf.mxu0
    %493 = vdwg.mxu0
    %s494 = scalar_lea.vmem [#allocation2], 40
    %495 = vst [vmem:[%s494] sm:$0xff] %v491
    %s496 = scalar_lea.vmem %s0, 48
    %v497 = vld [vmem:[%s496] sm:$0xff]
    %498 = vmatpush.bf16.msra.mxu0 0
    %499 = vmatpush.bf16.msra.mxu0 0
    %500 = vmatpush.bf16.msra.mxu0 0
    %501 = vmatpush.bf16.msra.mxu0 0
    %502 = vmatpush.bf16.msra.mxu0 0
    %503 = vmatpush.bf16.msra.mxu0 0
    %504 = vmatpush.bf16.msra.mxu0 %v33
    %505 = vmatpush.bf16.msra.mxu0 %v32
    %506 = vmatmul.bf16.gmra.mxu0 %v479
    %v507 = vpop.f32.mrf.mxu0
    %v508 = vadd.f32 0.0, %v507
    %v509 = vpop.f32.mrf.mxu0
    %510 = vdwg.mxu0
    %v511 = vadd.f32 %v497, %v508
    %v512 = vxor.u32 %v511, 2147483648
    %v513 = vmul.f32 %v512, 1.442695
    %v514 = vpow.pop %v513
    %v515 = vadd.f32 %v514, 1.0
    %v516 = vrcp.pop %v515
    %v517 = vmul.f32 %v515, %v516
    %v518 = vsub.f32 1.0, %v517
    %v519 = vmul.f32 %v516, %v518
    %v520 = vadd.f32 %v516, %v519
    %vm521 = vweird.f32 %v515
    %vm522 = vweird.f32 %v516
    %vm523 = vmor %vm521, %vm522
    %v524 = vsel %vm523, %v516, %v520
    %v525 = vand.u32 2147483647, %v515
    %vm526 = vcmp.eq.f32.partialorder %v525, 8.507059e+37
    %v527 = vand.u32 %v515, 2147483648
    %v528 = vor.u32 1.1754944e-38, %v527
    %v529 = vsel %vm526, %v528, %v524
    %v530 = vmul.f32 1.0, %v529
    %v531 = vtanh.pop %v511
    %v532 = vmul.f32 %v530, %v467
    %534 = vrot.lane.b32.xlu0 %v531, 64
    %v535 = vpop.permute.xlu0 %534
    %v537 = vmul.f32 %v530, %v535
    %539 = vrot.lane.b32.xlu0 %v537, 32
    %v540 = vpop.permute.xlu0 %539
    %v542 = vadd.f32 %v532, %v540
    %v543 = vtanh.pop %v542
    %545 = vrot.lane.b32.xlu0 %v543, 64
    %v546 = vpop.permute.xlu0 %545
    %v548 = vmul.f32 %v530, %v546
    %v549 = vpack.c.bf16 %v548, %v548
    %551 = vrot.lane.b32.xlu0 %v549, 32
    %v552 = vpop.permute.xlu0 %551
    %v554 = vsel %vm45, %v552, 0
    %556 = vmatpush.bf16.msra.mxu0 0
    %557 = vmatpush.bf16.msra.mxu0 0
    %558 = vmatpush.bf16.msra.mxu0 0
    %559 = vmatpush.bf16.msra.mxu0 0
    %560 = vmatpush.bf16.msra.mxu0 0
    %561 = vmatpush.bf16.msra.mxu0 0
    %562 = vmatpush.bf16.msra.mxu0 %v39
    %563 = vmatpush.bf16.msra.mxu0 %v38
    %564 = vmatmul.bf16.gmra.mxu0 %v554
    %v565 = vpop.f32.mrf.mxu0
    %v566 = vadd.f32 %v42, %v565
    %v567 = vpop.f32.mrf.mxu0
    %568 = vdwg.mxu0
    %s569 = scalar_lea.vmem [#allocation2], 48
    %570 = vst [vmem:[%s569] sm:$0xff] %v566
    %s571 = scalar_lea.vmem %s0, 56
    %v572 = vld [vmem:[%s571] sm:$0xff]
    %573 = vmatpush.bf16.msra.mxu0 0
    %574 = vmatpush.bf16.msra.mxu0 0
    %575 = vmatpush.bf16.msra.mxu0 0
    %576 = vmatpush.bf16.msra.mxu0 0
    %577 = vmatpush.bf16.msra.mxu0 0
    %578 = vmatpush.bf16.msra.mxu0 0
    %579 = vmatpush.bf16.msra.mxu0 %v33
    %580 = vmatpush.bf16.msra.mxu0 %v32
    %581 = vmatmul.bf16.gmra.mxu0 %v554
    %v582 = vpop.f32.mrf.mxu0
    %v583 = vadd.f32 0.0, %v582
    %v584 = vpop.f32.mrf.mxu0
    %585 = vdwg.mxu0
    %v586 = vadd.f32 %v572, %v583
    %v587 = vxor.u32 %v586, 2147483648
    %v588 = vmul.f32 %v587, 1.442695
    %v589 = vpow.pop %v588
    %v590 = vadd.f32 %v589, 1.0
    %v591 = vrcp.pop %v590
    %v592 = vmul.f32 %v590, %v591
    %v593 = vsub.f32 1.0, %v592
    %v594 = vmul.f32 %v591, %v593
    %v595 = vadd.f32 %v591, %v594
    %vm596 = vweird.f32 %v590
    %vm597 = vweird.f32 %v591
    %vm598 = vmor %vm596, %vm597
    %v599 = vsel %vm598, %v591, %v595
    %v600 = vand.u32 2147483647, %v590
    %vm601 = vcmp.eq.f32.partialorder %v600, 8.507059e+37
    %v602 = vand.u32 %v590, 2147483648
    %v603 = vor.u32 1.1754944e-38, %v602
    %v604 = vsel %vm601, %v603, %v599
    %v605 = vmul.f32 1.0, %v604
    %v606 = vtanh.pop %v586
    %v607 = vmul.f32 %v605, %v542
    %609 = vrot.lane.b32.xlu0 %v606, 64
    %v610 = vpop.permute.xlu0 %609
    %v612 = vmul.f32 %v605, %v610
    %614 = vrot.lane.b32.xlu0 %v612, 32
    %v615 = vpop.permute.xlu0 %614
    %v617 = vadd.f32 %v607, %v615
    %v618 = vtanh.pop %v617
    %620 = vrot.lane.b32.xlu0 %v618, 64
    %v621 = vpop.permute.xlu0 %620
    %v623 = vmul.f32 %v605, %v621
    %v624 = vpack.c.bf16 %v623, %v623
    %626 = vrot.lane.b32.xlu0 %v624, 32
    %v627 = vpop.permute.xlu0 %626
    %v629 = vsel %vm45, %v627, 0
    %631 = vmatpush.bf16.msra.mxu0 0
    %632 = vmatpush.bf16.msra.mxu0 0
    %633 = vmatpush.bf16.msra.mxu0 0
    %634 = vmatpush.bf16.msra.mxu0 0
    %635 = vmatpush.bf16.msra.mxu0 0
    %636 = vmatpush.bf16.msra.mxu0 0
    %637 = vmatpush.bf16.msra.mxu0 %v39
    %638 = vmatpush.bf16.msra.mxu0 %v38
    %639 = vmatmul.bf16.gmra.mxu0 %v629
    %v640 = vpop.f32.mrf.mxu0
    %v641 = vadd.f32 %v42, %v640
    %v642 = vpop.f32.mrf.mxu0
    %643 = vdwg.mxu0
    %s644 = scalar_lea.vmem [#allocation2], 56
    %645 = vst [vmem:[%s644] sm:$0xff] %v641
    %v646 = vld [vmem:[%s2] sm:$0xff]
    %v647 = vld [vmem:[%s2 + $0x8] sm:$0xff]
    %v648 = vld [vmem:[%s2 + $0x10] sm:$0xff]
    %v649 = vld [vmem:[%s2 + $0x18] sm:$0xff]
    %v650 = vpack.c.bf16 %v647, %v646
    %v651 = vpack.c.bf16 %v649, %v648
    %v652 = vld [vmem:[#allocation2] sm:$0xff]
    %653 = vmatpush.bf16.msra.mxu0 0
    %654 = vmatpush.bf16.msra.mxu0 0
    %655 = vmatpush.bf16.msra.mxu0 0
    %656 = vmatpush.bf16.msra.mxu0 0
    %657 = vmatpush.bf16.msra.mxu0 0
    %658 = vmatpush.bf16.msra.mxu0 0
    %659 = vmatpush.bf16.msra.mxu0 %v651
    %660 = vmatpush.bf16.msra.mxu0 %v650
    %661 = vmatmul.bf16.gmra.mxu0 %v47
    %v662 = vpop.f32.mrf.mxu0
    %v663 = vadd.f32 0.0, %v662
    %v664 = vpop.f32.mrf.mxu0
    %665 = vdwg.mxu0
    %v666 = vadd.f32 %v652, %v663
    %v667 = vxor.u32 %v666, 2147483648
    %v668 = vmul.f32 %v667, 1.442695
    %v669 = vpow.pop %v668
    %v670 = vadd.f32 %v669, 1.0
    %v671 = vrcp.pop %v670
    %v672 = vmul.f32 %v670, %v671
    %v673 = vsub.f32 1.0, %v672
    %v674 = vmul.f32 %v671, %v673
    %v675 = vadd.f32 %v671, %v674
    %vm676 = vweird.f32 %v670
    %vm677 = vweird.f32 %v671
    %vm678 = vmor %vm676, %vm677
    %v679 = vsel %vm678, %v671, %v675
    %v680 = vand.u32 2147483647, %v670
    %vm681 = vcmp.eq.f32.partialorder %v680, 8.507059e+37
    %v682 = vand.u32 %v670, 2147483648
    %v683 = vor.u32 1.1754944e-38, %v682
    %v684 = vsel %vm681, %v683, %v679
    %v685 = vmul.f32 1.0, %v684
    %v686 = vtanh.pop %v666
    %v687 = vmul.f32 %v685, 0.0
    %689 = vrot.lane.b32.xlu0 %v686, 64
    %v690 = vpop.permute.xlu0 %689
    %v692 = vmul.f32 %v685, %v690
    %694 = vrot.lane.b32.xlu0 %v692, 32
    %v695 = vpop.permute.xlu0 %694
    %v697 = vadd.f32 %v687, %v695
    %v698 = vtanh.pop %v697
    %700 = vrot.lane.b32.xlu0 %v698, 64
    %v701 = vpop.permute.xlu0 %700
    %v703 = vmul.f32 %v685, %v701
    %v704 = vld [vmem:[%s194] sm:$0xff]
    %v705 = vpack.c.bf16 %v703, %v703
    %707 = vrot.lane.b32.xlu0 %v705, 32
    %v708 = vpop.permute.xlu0 %707
    %v710 = vsel %vm45, %v708, 0
    %712 = vmatpush.bf16.msra.mxu0 0
    %713 = vmatpush.bf16.msra.mxu0 0
    %714 = vmatpush.bf16.msra.mxu0 0
    %715 = vmatpush.bf16.msra.mxu0 0
    %716 = vmatpush.bf16.msra.mxu0 0
    %717 = vmatpush.bf16.msra.mxu0 0
    %718 = vmatpush.bf16.msra.mxu0 %v651
    %719 = vmatpush.bf16.msra.mxu0 %v650
    %720 = vmatmul.bf16.gmra.mxu0 %v710
    %v721 = vpop.f32.mrf.mxu0
    %v722 = vadd.f32 0.0, %v721
    %v723 = vpop.f32.mrf.mxu0
    %724 = vdwg.mxu0
    %v725 = vadd.f32 %v704, %v722
    %v726 = vxor.u32 %v725, 2147483648
    %v727 = vmul.f32 %v726, 1.442695
    %v728 = vpow.pop %v727
    %v729 = vadd.f32 %v728, 1.0
    %v730 = vrcp.pop %v729
    %v731 = vmul.f32 %v729, %v730
    %v732 = vsub.f32 1.0, %v731
    %v733 = vmul.f32 %v730, %v732
    %v734 = vadd.f32 %v730, %v733
    %vm735 = vweird.f32 %v729
    %vm736 = vweird.f32 %v730
    %vm737 = vmor %vm735, %vm736
    %v738 = vsel %vm737, %v730, %v734
    %v739 = vand.u32 2147483647, %v729
    %vm740 = vcmp.eq.f32.partialorder %v739, 8.507059e+37
    %v741 = vand.u32 %v729, 2147483648
    %v742 = vor.u32 1.1754944e-38, %v741
    %v743 = vsel %vm740, %v742, %v738
    %v744 = vmul.f32 1.0, %v743
    %v745 = vtanh.pop %v725
    %v746 = vmul.f32 %v744, %v697
    %748 = vrot.lane.b32.xlu0 %v745, 64
    %v749 = vpop.permute.xlu0 %748
    %v751 = vmul.f32 %v744, %v749
    %753 = vrot.lane.b32.xlu0 %v751, 32
    %v754 = vpop.permute.xlu0 %753
    %v756 = vadd.f32 %v746, %v754
    %v757 = vtanh.pop %v756
    %759 = vrot.lane.b32.xlu0 %v757, 64
    %v760 = vpop.permute.xlu0 %759
    %v762 = vmul.f32 %v744, %v760
    %v763 = vld [vmem:[%s269] sm:$0xff]
    %v764 = vpack.c.bf16 %v762, %v762
    %766 = vrot.lane.b32.xlu0 %v764, 32
    %v767 = vpop.permute.xlu0 %766
    %v769 = vsel %vm45, %v767, 0
    %771 = vmatpush.bf16.msra.mxu0 0
    %772 = vmatpush.bf16.msra.mxu0 0
    %773 = vmatpush.bf16.msra.mxu0 0
    %774 = vmatpush.bf16.msra.mxu0 0
    %775 = vmatpush.bf16.msra.mxu0 0
    %776 = vmatpush.bf16.msra.mxu0 0
    %777 = vmatpush.bf16.msra.mxu0 %v651
    %778 = vmatpush.bf16.msra.mxu0 %v650
    %779 = vmatmul.bf16.gmra.mxu0 %v769
    %v780 = vpop.f32.mrf.mxu0
    %v781 = vadd.f32 0.0, %v780
    %v782 = vpop.f32.mrf.mxu0
    %783 = vdwg.mxu0
    %v784 = vadd.f32 %v763, %v781
    %v785 = vxor.u32 %v784, 2147483648
    %v786 = vmul.f32 %v785, 1.442695
    %v787 = vpow.pop %v786
    %v788 = vadd.f32 %v787, 1.0
    %v789 = vrcp.pop %v788
    %v790 = vmul.f32 %v788, %v789
    %v791 = vsub.f32 1.0, %v790
    %v792 = vmul.f32 %v789, %v791
    %v793 = vadd.f32 %v789, %v792
    %vm794 = vweird.f32 %v788
    %vm795 = vweird.f32 %v789
    %vm796 = vmor %vm794, %vm795
    %v797 = vsel %vm796, %v789, %v793
    %v798 = vand.u32 2147483647, %v788
    %vm799 = vcmp.eq.f32.partialorder %v798, 8.507059e+37
    %v800 = vand.u32 %v788, 2147483648
    %v801 = vor.u32 1.1754944e-38, %v800
    %v802 = vsel %vm799, %v801, %v797
    %v803 = vmul.f32 1.0, %v802
    %v804 = vtanh.pop %v784
    %v805 = vmul.f32 %v803, %v756
    %807 = vrot.lane.b32.xlu0 %v804, 64
    %v808 = vpop.permute.xlu0 %807
    %v810 = vmul.f32 %v803, %v808
    %812 = vrot.lane.b32.xlu0 %v810, 32
    %v813 = vpop.permute.xlu0 %812
    %v815 = vadd.f32 %v805, %v813
    %v816 = vtanh.pop %v815
    %818 = vrot.lane.b32.xlu0 %v816, 64
    %v819 = vpop.permute.xlu0 %818
    %v821 = vmul.f32 %v803, %v819
    %v822 = vld [vmem:[%s344] sm:$0xff]
    %v823 = vpack.c.bf16 %v821, %v821
    %825 = vrot.lane.b32.xlu0 %v823, 32
    %v826 = vpop.permute.xlu0 %825
    %v828 = vsel %vm45, %v826, 0
    %830 = vmatpush.bf16.msra.mxu0 0
    %831 = vmatpush.bf16.msra.mxu0 0
    %832 = vmatpush.bf16.msra.mxu0 0
    %833 = vmatpush.bf16.msra.mxu0 0
    %834 = vmatpush.bf16.msra.mxu0 0
    %835 = vmatpush.bf16.msra.mxu0 0
    %836 = vmatpush.bf16.msra.mxu0 %v651
    %837 = vmatpush.bf16.msra.mxu0 %v650
    %838 = vmatmul.bf16.gmra.mxu0 %v828
    %v839 = vpop.f32.mrf.mxu0
    %v840 = vadd.f32 0.0, %v839
    %v841 = vpop.f32.mrf.mxu0
    %842 = vdwg.mxu0
    %v843 = vadd.f32 %v822, %v840
    %v844 = vxor.u32 %v843, 2147483648
    %v845 = vmul.f32 %v844, 1.442695
    %v846 = vpow.pop %v845
    %v847 = vadd.f32 %v846, 1.0
    %v848 = vrcp.pop %v847
    %v849 = vmul.f32 %v847, %v848
    %v850 = vsub.f32 1.0, %v849
    %v851 = vmul.f32 %v848, %v850
    %v852 = vadd.f32 %v848, %v851
    %vm853 = vweird.f32 %v847
    %vm854 = vweird.f32 %v848
    %vm855 = vmor %vm853, %vm854
    %v856 = vsel %vm855, %v848, %v852
    %v857 = vand.u32 2147483647, %v847
    %vm858 = vcmp.eq.f32.partialorder %v857, 8.507059e+37
    %v859 = vand.u32 %v847, 2147483648
    %v860 = vor.u32 1.1754944e-38, %v859
    %v861 = vsel %vm858, %v860, %v856
    %v862 = vmul.f32 1.0, %v861
    %v863 = vtanh.pop %v843
    %v864 = vmul.f32 %v862, %v815
    %866 = vrot.lane.b32.xlu0 %v863, 64
    %v867 = vpop.permute.xlu0 %866
    %v869 = vmul.f32 %v862, %v867
    %871 = vrot.lane.b32.xlu0 %v869, 32
    %v872 = vpop.permute.xlu0 %871
    %v874 = vadd.f32 %v864, %v872
    %v875 = vtanh.pop %v874
    %877 = vrot.lane.b32.xlu0 %v875, 64
    %v878 = vpop.permute.xlu0 %877
    %v880 = vmul.f32 %v862, %v878
    %v881 = vld [vmem:[%s419] sm:$0xff]
    %v882 = vpack.c.bf16 %v880, %v880
    %884 = vrot.lane.b32.xlu0 %v882, 32
    %v885 = vpop.permute.xlu0 %884
    %v887 = vsel %vm45, %v885, 0
    %889 = vmatpush.bf16.msra.mxu0 0
    %890 = vmatpush.bf16.msra.mxu0 0
    %891 = vmatpush.bf16.msra.mxu0 0
    %892 = vmatpush.bf16.msra.mxu0 0
    %893 = vmatpush.bf16.msra.mxu0 0
    %894 = vmatpush.bf16.msra.mxu0 0
    %895 = vmatpush.bf16.msra.mxu0 %v651
    %896 = vmatpush.bf16.msra.mxu0 %v650
    %897 = vmatmul.bf16.gmra.mxu0 %v887
    %v898 = vpop.f32.mrf.mxu0
    %v899 = vadd.f32 0.0, %v898
    %v900 = vpop.f32.mrf.mxu0
    %901 = vdwg.mxu0
    %v902 = vadd.f32 %v881, %v899
    %v903 = vxor.u32 %v902, 2147483648
    %v904 = vmul.f32 %v903, 1.442695
    %v905 = vpow.pop %v904
    %v906 = vadd.f32 %v905, 1.0
    %v907 = vrcp.pop %v906
    %v908 = vmul.f32 %v906, %v907
    %v909 = vsub.f32 1.0, %v908
    %v910 = vmul.f32 %v907, %v909
    %v911 = vadd.f32 %v907, %v910
    %vm912 = vweird.f32 %v906
    %vm913 = vweird.f32 %v907
    %vm914 = vmor %vm912, %vm913
    %v915 = vsel %vm914, %v907, %v911
    %v916 = vand.u32 2147483647, %v906
    %vm917 = vcmp.eq.f32.partialorder %v916, 8.507059e+37
    %v918 = vand.u32 %v906, 2147483648
    %v919 = vor.u32 1.1754944e-38, %v918
    %v920 = vsel %vm917, %v919, %v915
    %v921 = vmul.f32 1.0, %v920
    %v922 = vtanh.pop %v902
    %v923 = vmul.f32 %v921, %v874
    %925 = vrot.lane.b32.xlu0 %v922, 64
    %v926 = vpop.permute.xlu0 %925
    %v928 = vmul.f32 %v921, %v926
    %930 = vrot.lane.b32.xlu0 %v928, 32
    %v931 = vpop.permute.xlu0 %930
    %v933 = vadd.f32 %v923, %v931
    %v934 = vtanh.pop %v933
    %936 = vrot.lane.b32.xlu0 %v934, 64
    %v937 = vpop.permute.xlu0 %936
    %v939 = vmul.f32 %v921, %v937
    %v940 = vld [vmem:[%s494] sm:$0xff]
    %v941 = vpack.c.bf16 %v939, %v939
    %943 = vrot.lane.b32.xlu0 %v941, 32
    %v944 = vpop.permute.xlu0 %943
    %v946 = vsel %vm45, %v944, 0
    %948 = vmatpush.bf16.msra.mxu0 0
    %949 = vmatpush.bf16.msra.mxu0 0
    %950 = vmatpush.bf16.msra.mxu0 0
    %951 = vmatpush.bf16.msra.mxu0 0
    %952 = vmatpush.bf16.msra.mxu0 0
    %953 = vmatpush.bf16.msra.mxu0 0
    %954 = vmatpush.bf16.msra.mxu0 %v651
    %955 = vmatpush.bf16.msra.mxu0 %v650
    %956 = vmatmul.bf16.gmra.mxu0 %v946
    %v957 = vpop.f32.mrf.mxu0
    %v958 = vadd.f32 0.0, %v957
    %v959 = vpop.f32.mrf.mxu0
    %960 = vdwg.mxu0
    %v961 = vadd.f32 %v940, %v958
    %v962 = vxor.u32 %v961, 2147483648
    %v963 = vmul.f32 %v962, 1.442695
    %v964 = vpow.pop %v963
    %v965 = vadd.f32 %v964, 1.0
    %v966 = vrcp.pop %v965
    %v967 = vmul.f32 %v965, %v966
    %v968 = vsub.f32 1.0, %v967
    %v969 = vmul.f32 %v966, %v968
    %v970 = vadd.f32 %v966, %v969
    %vm971 = vweird.f32 %v965
    %vm972 = vweird.f32 %v966
    %vm973 = vmor %vm971, %vm972
    %v974 = vsel %vm973, %v966, %v970
    %v975 = vand.u32 2147483647, %v965
    %vm976 = vcmp.eq.f32.partialorder %v975, 8.507059e+37
    %v977 = vand.u32 %v965, 2147483648
    %v978 = vor.u32 1.1754944e-38, %v977
    %v979 = vsel %vm976, %v978, %v974
    %v980 = vmul.f32 1.0, %v979
    %v981 = vtanh.pop %v961
    %v982 = vmul.f32 %v980, %v933
    %984 = vrot.lane.b32.xlu0 %v981, 64
    %v985 = vpop.permute.xlu0 %984
    %v987 = vmul.f32 %v980, %v985
    %989 = vrot.lane.b32.xlu0 %v987, 32
    %v990 = vpop.permute.xlu0 %989
    %v992 = vadd.f32 %v982, %v990
    %v993 = vtanh.pop %v992
    %995 = vrot.lane.b32.xlu0 %v993, 64
    %v996 = vpop.permute.xlu0 %995
    %v998 = vmul.f32 %v980, %v996
    %v999 = vld [vmem:[%s569] sm:$0xff]
    %v1000 = vpack.c.bf16 %v998, %v998
    %1002 = vrot.lane.b32.xlu0 %v1000, 32
    %v1003 = vpop.permute.xlu0 %1002
    %v1005 = vsel %vm45, %v1003, 0
    %1007 = vmatpush.bf16.msra.mxu0 0
    %1008 = vmatpush.bf16.msra.mxu0 0
    %1009 = vmatpush.bf16.msra.mxu0 0
    %1010 = vmatpush.bf16.msra.mxu0 0
    %1011 = vmatpush.bf16.msra.mxu0 0
    %1012 = vmatpush.bf16.msra.mxu0 0
    %1013 = vmatpush.bf16.msra.mxu0 %v651
    %1014 = vmatpush.bf16.msra.mxu0 %v650
    %1015 = vmatmul.bf16.gmra.mxu0 %v1005
    %v1016 = vpop.f32.mrf.mxu0
    %v1017 = vadd.f32 0.0, %v1016
    %v1018 = vpop.f32.mrf.mxu0
    %1019 = vdwg.mxu0
    %v1020 = vadd.f32 %v999, %v1017
    %v1021 = vxor.u32 %v1020, 2147483648
    %v1022 = vmul.f32 %v1021, 1.442695
    %v1023 = vpow.pop %v1022
    %v1024 = vadd.f32 %v1023, 1.0
    %v1025 = vrcp.pop %v1024
    %v1026 = vmul.f32 %v1024, %v1025
    %v1027 = vsub.f32 1.0, %v1026
    %v1028 = vmul.f32 %v1025, %v1027
    %v1029 = vadd.f32 %v1025, %v1028
    %vm1030 = vweird.f32 %v1024
    %vm1031 = vweird.f32 %v1025
    %vm1032 = vmor %vm1030, %vm1031
    %v1033 = vsel %vm1032, %v1025, %v1029
    %v1034 = vand.u32 2147483647, %v1024
    %vm1035 = vcmp.eq.f32.partialorder %v1034, 8.507059e+37
    %v1036 = vand.u32 %v1024, 2147483648
    %v1037 = vor.u32 1.1754944e-38, %v1036
    %v1038 = vsel %vm1035, %v1037, %v1033
    %v1039 = vmul.f32 1.0, %v1038
    %v1040 = vtanh.pop %v1020
    %v1041 = vmul.f32 %v1039, %v992
    %1043 = vrot.lane.b32.xlu0 %v1040, 64
    %v1044 = vpop.permute.xlu0 %1043
    %v1046 = vmul.f32 %v1039, %v1044
    %1048 = vrot.lane.b32.xlu0 %v1046, 32
    %v1049 = vpop.permute.xlu0 %1048
    %v1051 = vadd.f32 %v1041, %v1049
    %v1052 = vtanh.pop %v1051
    %1054 = vrot.lane.b32.xlu0 %v1052, 64
    %v1055 = vpop.permute.xlu0 %1054
    %v1057 = vmul.f32 %v1039, %v1055
    %v1058 = vld [vmem:[%s644] sm:$0xff]
    %v1059 = vpack.c.bf16 %v1057, %v1057
    %1061 = vrot.lane.b32.xlu0 %v1059, 32
    %v1062 = vpop.permute.xlu0 %1061
    %v1064 = vsel %vm45, %v1062, 0
    %1066 = vmatpush.bf16.msra.mxu0 0
    %1067 = vmatpush.bf16.msra.mxu0 0
    %1068 = vmatpush.bf16.msra.mxu0 0
    %1069 = vmatpush.bf16.msra.mxu0 0
    %1070 = vmatpush.bf16.msra.mxu0 0
    %1071 = vmatpush.bf16.msra.mxu0 0
    %1072 = vmatpush.bf16.msra.mxu0 %v651
    %1073 = vmatpush.bf16.msra.mxu0 %v650
    %1074 = vmatmul.bf16.gmra.mxu0 %v1064
    %v1075 = vpop.f32.mrf.mxu0
    %v1076 = vadd.f32 0.0, %v1075
    %v1077 = vpop.f32.mrf.mxu0
    %1078 = vdwg.mxu0
    %v1079 = vadd.f32 %v1058, %v1076
    %v1080 = vxor.u32 %v1079, 2147483648
    %v1081 = vmul.f32 %v1080, 1.442695
    %v1082 = vpow.pop %v1081
    %v1083 = vadd.f32 %v1082, 1.0
    %v1084 = vrcp.pop %v1083
    %v1085 = vmul.f32 %v1083, %v1084
    %v1086 = vsub.f32 1.0, %v1085
    %v1087 = vmul.f32 %v1084, %v1086
    %v1088 = vadd.f32 %v1084, %v1087
    %vm1089 = vweird.f32 %v1083
    %vm1090 = vweird.f32 %v1084
    %vm1091 = vmor %vm1089, %vm1090
    %v1092 = vsel %vm1091, %v1084, %v1088
    %v1093 = vand.u32 2147483647, %v1083
    %vm1094 = vcmp.eq.f32.partialorder %v1093, 8.507059e+37
    %v1095 = vand.u32 %v1083, 2147483648
    %v1096 = vor.u32 1.1754944e-38, %v1095
    %v1097 = vsel %vm1094, %v1096, %v1092
    %v1098 = vmul.f32 1.0, %v1097
    %v1099 = vtanh.pop %v1079
    %v1100 = vmul.f32 %v1098, %v1051
    %1102 = vrot.lane.b32.xlu0 %v1099, 64
    %v1103 = vpop.permute.xlu0 %1102
    %v1105 = vmul.f32 %v1098, %v1103
    %1107 = vrot.lane.b32.xlu0 %v1105, 32
    %v1108 = vpop.permute.xlu0 %1107
    %v1110 = vadd.f32 %v1100, %v1108
    %v1111 = vtanh.pop %v1110
    %1113 = vrot.lane.b32.xlu0 %v1111, 64
    %v1114 = vpop.permute.xlu0 %1113
    %v1116 = vmul.f32 %v1098, %v1114
    %1118 = vrot.lane.b32.xlu0 %v623, 32
    %v1119 = vpop.permute.xlu0 %1118
    %1122 = vrot.lane.b32.xlu0 %v1116, 96
    %v1123 = vpop.permute.xlu0 %1122
    %1126 = vrot.lane.b32.xlu0 %v1110, 64
    %v1127 = vpop.permute.xlu0 %1126
    %v1129 = vsel %vm45, %v1119, %v617
    %vm1130 = vcmask 523264
    %v1131 = vsel %vm1130, %v1129, %v1123
    %vm1132 = vcmask 785408
    %v1133 = vsel %vm1132, %v1131, %v1127
    %v1134 = vtanh.pop %v1133
    %v1135 = vpack.c.bf16 %v1134, %v1134
    %v1136 = vld [vmem:[%s5] sm:$0xff]
    %v1137 = vld [vmem:[%s5 + $0x8] sm:$0xff]
    %v1138 = vld [vmem:[%s5 + $0x10] sm:$0xff]
    %v1139 = vld [vmem:[%s5 + $0x18] sm:$0xff]
    %v1140 = vld [vmem:[%s5 + $0x20] sm:$0xff]
    %v1141 = vld [vmem:[%s5 + $0x28] sm:$0xff]
    %v1142 = vld [vmem:[%s5 + $0x30] sm:$0xff]
    %v1143 = vld [vmem:[%s5 + $0x38] sm:$0xff]
    %v1144 = vld [vmem:[%s5 + $0x40] sm:$0xff]
    %v1145 = vld [vmem:[%s5 + $0x48] sm:$0xff]
    %v1146 = vld [vmem:[%s5 + $0x50] sm:$0xff]
    %v1147 = vld [vmem:[%s5 + $0x58] sm:$0xff]
    %v1148 = vld [vmem:[%s5 + $0x60] sm:$0xff]
    %v1149 = vld [vmem:[%s5 + $0x68] sm:$0xff]
    %v1150 = vld [vmem:[%s5 + $0x70] sm:$0xff]
    %v1151 = vld [vmem:[%s5 + $0x78] sm:$0xff]
    %v1152 = vpack.c.bf16 %v1137, %v1136
    %v1153 = vpack.c.bf16 %v1139, %v1138
    %v1154 = vpack.c.bf16 %v1141, %v1140
    %v1155 = vpack.c.bf16 %v1143, %v1142
    %v1156 = vpack.c.bf16 %v1145, %v1144
    %v1157 = vpack.c.bf16 %v1147, %v1146
    %v1158 = vpack.c.bf16 %v1149, %v1148
    %v1159 = vpack.c.bf16 %v1151, %v1150
    %v1160 = vld [vmem:[%s6] sm:$0x1]
    %v1162 = vperm.slane %v1160, 0
    %1164 = vmatpush.bf16.msra.mxu0 %v1159
    %1165 = vmatpush.bf16.msra.mxu0 %v1158
    %1166 = vmatpush.bf16.msra.mxu0 %v1157
    %1167 = vmatpush.bf16.msra.mxu0 %v1156
    %1168 = vmatpush.bf16.msra.mxu0 %v1155
    %1169 = vmatpush.bf16.msra.mxu0 %v1154
    %1170 = vmatpush.bf16.msra.mxu0 %v1153
    %1171 = vmatpush.bf16.msra.mxu0 %v1152
    %1172 = vmatmul.bf16.gmra.mxu0 %v1135
    %v1173 = vpop.f32.mrf.mxu0
    %v1174 = vadd.f32 %v1162, %v1173
    %v1175 = vpop.f32.mrf.mxu0
    %1176 = vdwg.mxu0
    %1177 = vst.msk [vmem:[#allocation3] sm:$0xff] %vm45, %v1174
    // Predicated region
    $region30: #{tpu_custom_call.1} parent=1 // pred_check
      _
    $region31: #{tpu_custom_call.1} parent=1 // pred_check_branch
      %1179 = sbr.rel (0) target = $region33
    $region32: #{tpu_custom_call.1} parent=1 // pred_region
      %1181 = vsyncadd [#allocation4], 0
      %s1183 = sshll.u32 [#allocation3], 4
      %s1184 = int_to_ptr.vmem [resolvable:$true] %s1183
      %s1185 = sshll.u32 %s7, 4
      %s1186 = int_to_ptr.hbm [resolvable:$true] %s1185
      %1188 = dma.vmem_to_hbm [thread:$0]  %s1184, 128, %s1186, [#allocation4]
    $region33: #{tpu_custom_call.1} parent=1 // pred_fallthru
      _
    // Predicated region
    $region34: #{tpu_custom_call.1} parent=1 // pred_check
      _
    $region35: #{tpu_custom_call.1} parent=1 // pred_check_branch
      %1190 = sbr.rel (0) target = $region37
    $region36: #{tpu_custom_call.1} parent=1 // pred_region
      %1192 = dma.done [#allocation4], 128
    $region37: #{tpu_custom_call.1} parent=1 // pred_fallthru
      _
    %1193 = vsyncpa [#allocation4], 1

</llo_original>
